<compile_context>
chip_gen: v7x
topology: tpu7x:2x2x1
jax: 0.10.0
libtpu: 0.0.40
codegen_flags: <defaults>
</compile_context>

<pallas_src>
import functools

import jax
import jax.numpy as jnp
from jax.experimental import pallas as pl
from jax.experimental.pallas import tpu as pltpu

LANE = 128


def cnn1d_kernel(x_ref, wconv_ref, bconv_ref, wdense_ref, bdense_ref,
                 wdec_ref, bdec_ref, out_ref, *, pool_kernel_size):
    """One grid step == one batch tile of bt samples.

    x_ref      : (L, bt, C_in)          position-major input tile (im2col is
                                        rebuilt in-register, never in HBM)
    wconv_ref  : (K, C_in, C_pad)       conv weights, lane-padded out-channels
    bconv_ref  : (1, C_pad)
    wdense_ref : (l_pool*C_pad, D_pad)  dense weights, row index = p*C_pad + c
    bdense_ref : (1, D_pad)
    wdec_ref   : (D_pad, N_pad)
    bdec_ref   : (1, N_pad)
    out_ref    : (bt, N_pad)            lane-dense, unmasked store
    """
    L, bt, c_in = x_ref.shape
    ksz, _, c_pad = wconv_ref.shape
    l_out = L - ksz + 1
    l_pool = (l_out - pool_kernel_size) // pool_kernel_size + 1
    l_use = l_pool * pool_kernel_size          # conv rows the pool actually uses

    x = x_ref[...]                             # (L, bt, C_in)
    w_conv = wconv_ref[...]                    # (K, C_in, C_pad)

    # ---- Conv1d: K shift-and-matmul accumulations (one MXU chain) -----------
    # Each shifted slice is a leading-dim slice + tile-aligned leading-dim
    # merge (bt % 8 == 0) -> free; contraction dim C_in is tiny by design
    # (review item #8: the conv matmul shape is not the bottleneck).
    acc = None
    for k in range(ksz):                       # tiny static loop (K = 2)
        xk = x[k:k + l_use].reshape(l_use * bt, c_in)
        part = jnp.dot(xk, w_conv[k], preferred_element_type=jnp.float32)
        acc = part if acc is None else acc + part
    conv = jnp.maximum(acc + bconv_ref[...], 0.0)            # bias + ReLU

    # ---- MaxPool1d (kernel == stride == pool_kernel_size), vectorized -------
    # Row r = l*bt + b with l = p*pool + j -> split the leading dim (tile
    # aligned, pool*bt % 8 == 0) and max the j sub-slabs on the VPU.
    conv3 = conv.reshape(l_pool, pool_kernel_size * bt, c_pad)
    pooled = conv3[:, 0:bt, :]
    for j in range(1, pool_kernel_size):
        pooled = jnp.maximum(pooled, conv3[:, j * bt:(j + 1) * bt, :])
    # pooled: (l_pool, bt, C_pad)

    # ---- Flatten + dense Linear as ONE matmul (K = l_pool * C_pad) ----------
    # Lane-axis concat of full 128-lane slabs: no cross-lane shuffling, and it
    # removes the (l_pool, bt, 128) f32 intermediate + per-p micro-matmuls.
    flat = jnp.concatenate([pooled[p] for p in range(l_pool)], axis=-1)
    h = jnp.dot(flat, wdense_ref[...], preferred_element_type=jnp.float32)
    h = jnp.maximum(h + bdense_ref[...], 0.0)                 # bias + ReLU

    # ---- Decision layer ------------------------------------------------------
    out = jnp.dot(h, wdec_ref[...], preferred_element_type=jnp.float32)
    out_ref[...] = (out + bdec_ref[...]).astype(out_ref.dtype)


def _round_up(n, m):
    return ((n + m - 1) // m) * m


def _pad_lane(n):
    return _round_up(n, LANE)


def _weight_spec(shape):
    """Grid-invariant operand: constant index_map (no re-DMA across steps).

    Single-buffer it (pl.Buffered(1)) when the running JAX exposes
    pipeline_mode, saving ~0.5 MiB VMEM (wdense alone is 448 KiB x2).
    """
    index_map = lambda i: (0,) * len(shape)
    buffered = getattr(pl, "Buffered", None)
    if buffered is not None:
        try:
            return pl.BlockSpec(shape, index_map, pipeline_mode=buffered(1))
        except TypeError:
            pass
    return pl.BlockSpec(shape, index_map)


def _pick_batch_tile(batch, batch_tile):
    """Clamp the requested tile to the batch, keep >= 2 grid steps if possible."""
    b8 = _round_up(max(batch, 1), 8)
    bt = min(_round_up(batch_tile, 8), b8)
    if b8 // bt < 2 and b8 >= 16:
        # Split into (at least) two tiles so dimension_semantics=("parallel",)
        # can shard the grid across v7x's two TensorCores.
        bt = _round_up(pl.cdiv(b8, 2), 8)
    b_pad = _round_up(b8, bt)
    return bt, b_pad


def cnn1d_forward(x, params, *, pool_kernel_size, batch_tile=256):
    """x: (B, n_features, n_dim) float32 -> (B, n_class) float32.

    batch_tile defaults to 256 (fills the MXU on v6e/v7x; >=128 is enough on
    v5e).  For very long sequences or much larger tiles, re-budget VMEM
    (x tile is L*bt*128 lanes f32, double-buffered) - v7x has 64 MiB physical.
    """
    w_conv_pt, b_conv, w_dense_pt, b_dense, w_dec_pt, b_dec = params
    B, L, C_in = x.shape
    C_out, _, K = w_conv_pt.shape
    l_out = L - K + 1
    l_pool = (l_out - pool_kernel_size) // pool_kernel_size + 1
    densed = w_dense_pt.shape[0]
    n_class = w_dec_pt.shape[0]

    c_pad = _pad_lane(C_out)
    d_pad = _pad_lane(densed)
    n_pad = _pad_lane(n_class)

    bt, b_pad = _pick_batch_tile(B, batch_tile)

    # ---- wrapper-side re-layout (plain JAX glue, single pass over x) --------
    # Position-major input; NO K-inflated im2col copy is written to HBM.
    x_pm = jnp.transpose(x, (1, 0, 2))                        # (L, B, C_in)
    if b_pad != B:
        x_pm = jnp.pad(x_pm, ((0, 0), (0, b_pad - B), (0, 0)))

    # conv weights -> (K, C_in, C_pad)
    w_conv_k = jnp.pad(jnp.transpose(w_conv_pt, (2, 1, 0)),
                       ((0, 0), (0, 0), (0, c_pad - C_out)))
    b_conv_k = jnp.pad(b_conv, (0, c_pad - C_out)).reshape(1, c_pad)

    # dense weights: PyTorch flatten index = c*l_pool + p; kernel row index is
    # p*c_pad + c  ->  (l_pool, C_pad, D_pad) then a free leading-dim reshape.
    w_dense_k = jnp.transpose(w_dense_pt.reshape(densed, C_out, l_pool), (2, 1, 0))
    w_dense_k = jnp.pad(w_dense_k,
                        ((0, 0), (0, c_pad - C_out), (0, d_pad - densed)))
    w_dense_k = w_dense_k.reshape(l_pool * c_pad, d_pad)
    b_dense_k = jnp.pad(b_dense, (0, d_pad - densed)).reshape(1, d_pad)

    w_dec_k = jnp.pad(jnp.transpose(w_dec_pt, (1, 0)),
                      ((0, d_pad - densed), (0, n_pad - n_class)))
    b_dec_k = jnp.pad(b_dec, (0, n_pad - n_class)).reshape(1, n_pad)

    kernel = functools.partial(cnn1d_kernel, pool_kernel_size=pool_kernel_size)
    out = pl.pallas_call(
        kernel,
        out_shape=jax.ShapeDtypeStruct((b_pad, n_pad), jnp.float32),
        grid_spec=pltpu.PrefetchScalarGridSpec(
            num_scalar_prefetch=0,
            grid=(b_pad // bt,),
            in_specs=[
                pl.BlockSpec((L, bt, C_in), lambda i: (0, i, 0)),
                _weight_spec((K, C_in, c_pad)),
                _weight_spec((1, c_pad)),
                _weight_spec((l_pool * c_pad, d_pad)),
                _weight_spec((1, d_pad)),
                _weight_spec((d_pad, n_pad)),
                _weight_spec((1, n_pad)),
            ],
            out_specs=pl.BlockSpec((bt, n_pad), lambda i: (i, 0)),
        ),
        compiler_params=pltpu.CompilerParams(
            dimension_semantics=("parallel",),
            vmem_limit_bytes=32 * 1024 * 1024),
    )(x_pm, w_conv_k, b_conv_k, w_dense_k, b_dense_k, w_dec_k, b_dec_k)
    return out[:B, :n_class]


def reference_forward(x, params, *, pool_kernel_size):
    """Pure-JAX replica of the PyTorch forward (debug prints are no-ops)."""
    w_conv_pt, b_conv, w_dense_pt, b_dense, w_dec_pt, b_dec = params
    x_ncl = jnp.transpose(x, (0, 2, 1))             # Model.reshape / permute
    B = x_ncl.shape[0]
    C_out, C_in, K = w_conv_pt.shape
    L = x_ncl.shape[-1]
    l_out = L - K + 1
    cols = jnp.stack([x_ncl[:, :, k:k + l_out] for k in range(K)], axis=-1)
    conv = jnp.einsum('bclk,ock->bol', cols, w_conv_pt) + b_conv[None, :, None]
    conv = jnp.maximum(conv, 0.0)
    l_pool = (l_out - pool_kernel_size) // pool_kernel_size + 1
    pooled = conv[:, :, :l_pool * pool_kernel_size]
    pooled = pooled.reshape(B, C_out, l_pool, pool_kernel_size).max(-1)
    flat = pooled.reshape(B, C_out * l_pool)        # Flatten (channel-major)
    h = jnp.maximum(flat @ w_dense_pt.T + b_dense, 0.0)
    return h @ w_dec_pt.T + b_dec


if __name__ == "__main__":
    # Module hyper-params (Model.__init__ defaults except n_features / n_dim
    # bumped for a non-trivial hot path; batch=16 -> 2 parallel grid steps).
    n_features = 16     # sequence length L
    n_dim = 4           # input channels
    n_class = 2
    conv_kernel_num = 32
    conv_kernel_size = 2
    pool_kernel_size = 2
    densed_size = 32
    batch = 16

    l_out = n_features - conv_kernel_size + 1
    l_pool = (l_out - pool_kernel_size) // pool_kernel_size + 1
    fc_size = l_pool * conv_kernel_num             # matches _cal_fc_size * C_out

    key = jax.random.PRNGKey(0)
    kx, k1, k2, k3, k4, k5, k6 = jax.random.split(key, 7)

    x = jax.random.normal(kx, (batch, n_features, n_dim), jnp.float32)

    # Deterministic, PyTorch-shaped parameters (synthetic, not a checkpoint).
    w_conv = 0.1 * jax.random.normal(
        k1, (conv_kernel_num, n_dim, conv_kernel_size), jnp.float32)
    b_conv = 0.1 * jax.random.normal(k2, (conv_kernel_num,), jnp.float32)
    w_dense = 0.1 * jax.random.normal(k3, (densed_size, fc_size), jnp.float32)
    b_dense = 0.1 * jax.random.normal(k4, (densed_size,), jnp.float32)
    w_dec = 0.1 * jax.random.normal(k5, (n_class, densed_size), jnp.float32)
    b_dec = 0.1 * jax.random.normal(k6, (n_class,), jnp.float32)
    params = (w_conv, b_conv, w_dense, b_dense, w_dec, b_dec)

    out = cnn1d_forward(x, params, pool_kernel_size=pool_kernel_size)
    out = jax.block_until_ready(out)

    ref = reference_forward(x, params, pool_kernel_size=pool_kernel_size)
    assert out.shape == (batch, n_class), out.shape
    assert jnp.allclose(out, ref, atol=1e-4, rtol=1e-4), (out, ref)

    # TODO(synk): the PyTorch forward's `debug=True` shape-printing loop has
    # no compute effect and is intentionally not replicated.
    print("KERNEL_OK")
</pallas_src>

<mosaic_0001>
module attributes {stable_mosaic.version = 11 : i64} {
  func.func @cnn1d_kernel(%arg0: i32, %arg1: memref<16x8x4xf32, #tpu.memory_space<vmem>>, %arg2: memref<2x4x128xf32, #tpu.memory_space<vmem>>, %arg3: memref<1x128xf32, #tpu.memory_space<vmem>>, %arg4: memref<896x128xf32, #tpu.memory_space<vmem>>, %arg5: memref<1x128xf32, #tpu.memory_space<vmem>>, %arg6: memref<128x128xf32, #tpu.memory_space<vmem>>, %arg7: memref<1x128xf32, #tpu.memory_space<vmem>>, %arg8: memref<8x128xf32, #tpu.memory_space<vmem>>) attributes {dimension_semantics = [#tpu.dimension_semantics<parallel>], iteration_bounds = array<i64: 2>, scalar_prefetch = 0 : i64, scratch_operands = 0 : i64, tpu.core_type = #tpu.core_type<tc>, window_params = [{transform_indices = @transform_0, window_bounds = array<i64: 16, 8, 4>}, {pipeline_mode = #tpu.pipeline_mode<synchronous>, transform_indices = @transform_1, window_bounds = array<i64: 2, 4, 128>}, {pipeline_mode = #tpu.pipeline_mode<synchronous>, transform_indices = @transform_2, window_bounds = array<i64: 1, 128>}, {pipeline_mode = #tpu.pipeline_mode<synchronous>, transform_indices = @transform_3, window_bounds = array<i64: 896, 128>}, {pipeline_mode = #tpu.pipeline_mode<synchronous>, transform_indices = @transform_4, window_bounds = array<i64: 1, 128>}, {pipeline_mode = #tpu.pipeline_mode<synchronous>, transform_indices = @transform_5, window_bounds = array<i64: 128, 128>}, {pipeline_mode = #tpu.pipeline_mode<synchronous>, transform_indices = @transform_6, window_bounds = array<i64: 1, 128>}, {transform_indices = @transform_7, window_bounds = array<i64: 8, 128>}]} {
    %c0 = arith.constant 0 : index
    %c0_0 = arith.constant 0 : index
    %c0_1 = arith.constant 0 : index
    %0 = vector.load %arg1[%c0, %c0_0, %c0_1] : memref<16x8x4xf32, #tpu.memory_space<vmem>>, vector<16x8x4xf32>
    %c0_2 = arith.constant 0 : index
    %c0_3 = arith.constant 0 : index
    %c0_4 = arith.constant 0 : index
    %1 = vector.load %arg2[%c0_2, %c0_3, %c0_4] : memref<2x4x128xf32, #tpu.memory_space<vmem>>, vector<2x4x128xf32>
    %2 = vector.extract_strided_slice %0 {offsets = [0, 0, 0], sizes = [14, 8, 4], strides = [1, 1, 1]} : vector<16x8x4xf32> to vector<14x8x4xf32>
    %3 = vector.shape_cast %2 : vector<14x8x4xf32> to vector<112x4xf32>
    %4 = vector.extract_strided_slice %1 {offsets = [0, 0, 0], sizes = [1, 4, 128], strides = [1, 1, 1]} : vector<2x4x128xf32> to vector<1x4x128xf32>
    %5 = vector.shape_cast %4 : vector<1x4x128xf32> to vector<4x128xf32>
    %cst = arith.constant dense<0.000000e+00> : vector<112x128xf32>
    %6 = tpu.matmul %3, %5, %cst {dimension_numbers = #tpu.dot_dimension_numbers<[1], [0], [0], [1], [0, 0, 1, 1], [], []>} : vector<112x4xf32>, vector<4x128xf32>, vector<112x128xf32> -> vector<112x128xf32>
    %7 = vector.extract_strided_slice %0 {offsets = [1, 0, 0], sizes = [14, 8, 4], strides = [1, 1, 1]} : vector<16x8x4xf32> to vector<14x8x4xf32>
    %8 = vector.shape_cast %7 : vector<14x8x4xf32> to vector<112x4xf32>
    %9 = vector.extract_strided_slice %1 {offsets = [1, 0, 0], sizes = [1, 4, 128], strides = [1, 1, 1]} : vector<2x4x128xf32> to vector<1x4x128xf32>
    %10 = vector.shape_cast %9 : vector<1x4x128xf32> to vector<4x128xf32>
    %cst_5 = arith.constant dense<0.000000e+00> : vector<112x128xf32>
    %11 = tpu.matmul %8, %10, %cst_5 {dimension_numbers = #tpu.dot_dimension_numbers<[1], [0], [0], [1], [0, 0, 1, 1], [], []>} : vector<112x4xf32>, vector<4x128xf32>, vector<112x128xf32> -> vector<112x128xf32>
    %12 = arith.addf %6, %11 : vector<112x128xf32>
    %c0_6 = arith.constant 0 : index
    %c0_7 = arith.constant 0 : index
    %13 = vector.load %arg3[%c0_6, %c0_7] : memref<1x128xf32, #tpu.memory_space<vmem>>, vector<1x128xf32>
    %14 = vector.broadcast %13 : vector<1x128xf32> to vector<112x128xf32>
    %15 = arith.addf %12, %14 : vector<112x128xf32>
    %cst_8 = arith.constant 0.000000e+00 : f32
    %16 = vector.broadcast %cst_8 : f32 to vector<112x128xf32>
    %17 = arith.maximumf %15, %16 : vector<112x128xf32>
    %18 = vector.shape_cast %17 : vector<112x128xf32> to vector<7x16x128xf32>
    %19 = vector.extract_strided_slice %18 {offsets = [0, 0, 0], sizes = [7, 8, 128], strides = [1, 1, 1]} : vector<7x16x128xf32> to vector<7x8x128xf32>
    %20 = vector.extract_strided_slice %18 {offsets = [0, 8, 0], sizes = [7, 8, 128], strides = [1, 1, 1]} : vector<7x16x128xf32> to vector<7x8x128xf32>
    %21 = arith.maximumf %19, %20 : vector<7x8x128xf32>
    %22 = vector.extract_strided_slice %21 {offsets = [0, 0, 0], sizes = [1, 8, 128], strides = [1, 1, 1]} : vector<7x8x128xf32> to vector<1x8x128xf32>
    %23 = vector.shape_cast %22 : vector<1x8x128xf32> to vector<8x128xf32>
    %24 = vector.extract_strided_slice %21 {offsets = [1, 0, 0], sizes = [1, 8, 128], strides = [1, 1, 1]} : vector<7x8x128xf32> to vector<1x8x128xf32>
    %25 = vector.shape_cast %24 : vector<1x8x128xf32> to vector<8x128xf32>
    %26 = vector.extract_strided_slice %21 {offsets = [2, 0, 0], sizes = [1, 8, 128], strides = [1, 1, 1]} : vector<7x8x128xf32> to vector<1x8x128xf32>
    %27 = vector.shape_cast %26 : vector<1x8x128xf32> to vector<8x128xf32>
    %28 = vector.extract_strided_slice %21 {offsets = [3, 0, 0], sizes = [1, 8, 128], strides = [1, 1, 1]} : vector<7x8x128xf32> to vector<1x8x128xf32>
    %29 = vector.shape_cast %28 : vector<1x8x128xf32> to vector<8x128xf32>
    %30 = vector.extract_strided_slice %21 {offsets = [4, 0, 0], sizes = [1, 8, 128], strides = [1, 1, 1]} : vector<7x8x128xf32> to vector<1x8x128xf32>
    %31 = vector.shape_cast %30 : vector<1x8x128xf32> to vector<8x128xf32>
    %32 = vector.extract_strided_slice %21 {offsets = [5, 0, 0], sizes = [1, 8, 128], strides = [1, 1, 1]} : vector<7x8x128xf32> to vector<1x8x128xf32>
    %33 = vector.shape_cast %32 : vector<1x8x128xf32> to vector<8x128xf32>
    %34 = vector.extract_strided_slice %21 {offsets = [6, 0, 0], sizes = [1, 8, 128], strides = [1, 1, 1]} : vector<7x8x128xf32> to vector<1x8x128xf32>
    %35 = vector.shape_cast %34 : vector<1x8x128xf32> to vector<8x128xf32>
    %36 = tpu.concatenate %23, %25, %27, %29, %31, %33, %35 in 1 : vector<8x128xf32>, vector<8x128xf32>, vector<8x128xf32>, vector<8x128xf32>, vector<8x128xf32>, vector<8x128xf32>, vector<8x128xf32> -> vector<8x896xf32>
    %c0_9 = arith.constant 0 : index
    %c0_10 = arith.constant 0 : index
    %37 = vector.load %arg4[%c0_9, %c0_10] : memref<896x128xf32, #tpu.memory_space<vmem>>, vector<896x128xf32>
    %cst_11 = arith.constant dense<0.000000e+00> : vector<8x128xf32>
    %38 = tpu.matmul %36, %37, %cst_11 {dimension_numbers = #tpu.dot_dimension_numbers<[1], [0], [0], [1], [0, 0, 1, 1], [], []>} : vector<8x896xf32>, vector<896x128xf32>, vector<8x128xf32> -> vector<8x128xf32>
    %c0_12 = arith.constant 0 : index
    %c0_13 = arith.constant 0 : index
    %39 = vector.load %arg5[%c0_12, %c0_13] : memref<1x128xf32, #tpu.memory_space<vmem>>, vector<1x128xf32>
    %40 = vector.broadcast %39 : vector<1x128xf32> to vector<8x128xf32>
    %41 = arith.addf %38, %40 : vector<8x128xf32>
    %cst_14 = arith.constant 0.000000e+00 : f32
    %42 = vector.broadcast %cst_14 : f32 to vector<8x128xf32>
    %43 = arith.maximumf %41, %42 : vector<8x128xf32>
    %c0_15 = arith.constant 0 : index
    %c0_16 = arith.constant 0 : index
    %44 = vector.load %arg6[%c0_15, %c0_16] : memref<128x128xf32, #tpu.memory_space<vmem>>, vector<128x128xf32>
    %cst_17 = arith.constant dense<0.000000e+00> : vector<8x128xf32>
    %45 = tpu.matmul %43, %44, %cst_17 {dimension_numbers = #tpu.dot_dimension_numbers<[1], [0], [0], [1], [0, 0, 1, 1], [], []>} : vector<8x128xf32>, vector<128x128xf32>, vector<8x128xf32> -> vector<8x128xf32>
    %c0_18 = arith.constant 0 : index
    %c0_19 = arith.constant 0 : index
    %46 = vector.load %arg7[%c0_18, %c0_19] : memref<1x128xf32, #tpu.memory_space<vmem>>, vector<1x128xf32>
    %47 = vector.broadcast %46 : vector<1x128xf32> to vector<8x128xf32>
    %48 = arith.addf %45, %47 : vector<8x128xf32>
    %c0_20 = arith.constant 0 : index
    %c0_21 = arith.constant 0 : index
    %49 = vector.load %arg8[%c0_20, %c0_21] : memref<8x128xf32, #tpu.memory_space<vmem>>, vector<8x128xf32>
    tpu.vector_store %arg8[%c0_20, %c0_21], %48 {strides = array<i32>} : memref<8x128xf32, #tpu.memory_space<vmem>>, vector<8x128xf32>,
    return
  }
  func.func @transform_0(%arg0: i32) -> (i32, i32, i32) {
    %c0_i32 = arith.constant 0 : i32
    %c0_i32_0 = arith.constant 0 : i32
    %c0_i32_1 = arith.constant 0 : i32
    return %c0_i32, %arg0, %c0_i32_0 : i32, i32, i32
  }
  func.func @transform_1(%arg0: i32) -> (i32, i32, i32) {
    %c0_i32 = arith.constant 0 : i32
    %c0_i32_0 = arith.constant 0 : i32
    %c0_i32_1 = arith.constant 0 : i32
    %c0_i32_2 = arith.constant 0 : i32
    return %c0_i32, %c0_i32_0, %c0_i32_1 : i32, i32, i32
  }
  func.func @transform_2(%arg0: i32) -> (i32, i32) {
    %c0_i32 = arith.constant 0 : i32
    %c0_i32_0 = arith.constant 0 : i32
    %c0_i32_1 = arith.constant 0 : i32
    return %c0_i32, %c0_i32_0 : i32, i32
  }
  func.func @transform_3(%arg0: i32) -> (i32, i32) {
    %c0_i32 = arith.constant 0 : i32
    %c0_i32_0 = arith.constant 0 : i32
    %c0_i32_1 = arith.constant 0 : i32
    return %c0_i32, %c0_i32_0 : i32, i32
  }
  func.func @transform_4(%arg0: i32) -> (i32, i32) {
    %c0_i32 = arith.constant 0 : i32
    %c0_i32_0 = arith.constant 0 : i32
    %c0_i32_1 = arith.constant 0 : i32
    return %c0_i32, %c0_i32_0 : i32, i32
  }
  func.func @transform_5(%arg0: i32) -> (i32, i32) {
    %c0_i32 = arith.constant 0 : i32
    %c0_i32_0 = arith.constant 0 : i32
    %c0_i32_1 = arith.constant 0 : i32
    return %c0_i32, %c0_i32_0 : i32, i32
  }
  func.func @transform_6(%arg0: i32) -> (i32, i32) {
    %c0_i32 = arith.constant 0 : i32
    %c0_i32_0 = arith.constant 0 : i32
    %c0_i32_1 = arith.constant 0 : i32
    return %c0_i32, %c0_i32_0 : i32, i32
  }
  func.func @transform_7(%arg0: i32) -> (i32, i32) {
    %c0_i32 = arith.constant 0 : i32
    %c0_i32_0 = arith.constant 0 : i32
    return %arg0, %c0_i32 : i32, i32
  }
}

</mosaic_0001>

<llo_original>
// kernel: tpu_custom_call.1
$region0: #{tpu_custom_call.1}
  #allocation0 [shape = 'u32[]', space=smem, size = 0x4, offset = 0x4, fixed_abs, tag = 'smem constant byte address 0x4 - core index']
  #allocation1 [shape = 'u32[144,128]{1,0:T(1,128)}', space=vmem, size = 0x12000, scoped, tag = 'internal scratch']
  %s0 = inlined_call_operand.vmem [shape: f32[16,16,4], index: 0, kind: input, shape index: {}]
  %s1 = inlined_call_operand.vmem [shape: f32[2,4,128], index: 1, kind: input, shape index: {}]
  %s2 = inlined_call_operand.vmem [shape: f32[1,128], index: 2, kind: input, shape index: {}]
  %s3 = inlined_call_operand.hbm [shape: f32[896,128], index: 3, kind: input, shape index: {}]
  %s4 = inlined_call_operand.vmem [shape: f32[1,128], index: 4, kind: input, shape index: {}]
  %s5 = inlined_call_operand.vmem [shape: f32[128,128], index: 5, kind: input, shape index: {}]
  %s6 = inlined_call_operand.vmem [shape: f32[1,128], index: 6, kind: input, shape index: {}]
  %s7 = inlined_call_operand.hbm [shape: f32[16,128], index: 7, kind: output, shape index: {}]
  %s8 = sld [smem:[#allocation0]]
  $region103: #{tpu_custom_call.1} parent=0
    _
  %s10 = ssub.s32 1, %s8
  %s11 = scalar_select 0, %s10, %s8
  $region1: #{tpu_custom_call.1} parent=0
    #allocation2 [shape = 'u8[131072]{0}', space=vmem, size = 0x20000, scoped, tag = 'input window, operand 0']
    #allocation3 [shape = 'u8[458752]{0}', space=vmem, size = 0x70000, scoped, tag = 'input window, operand 3, single buffered']
    #allocation4 [shape = 's32[2]{0}', space=sflag, size = 0x8, scoped, tag = 'scoped memory for tpu_custom_call.1']
    #allocation5 [shape = 's32[2]{0}', space=sflag, size = 0x8, scoped, tag = 'scoped memory for tpu_custom_call.1']
    #allocation6 [shape = 'u8[8192]{0}', space=vmem, size = 0x2000, scoped, tag = 'output window, operand 0']
    %12 = vsyncpa [#allocation4], 0
    %13 = vsyncpa [#allocation5], 0
    %s14 = scalar_lea.sflag [#allocation5], 1
    %15 = vsyncpa %s14, 0
    loop: start=0, step=1, limit=4
    $region2: #{tpu_custom_call.1} parent=1 // loop_pre_header
      _
    $region3: #{tpu_custom_call.1} parent=1 // loop_header
      %s17 = sphi 0, %s21
      %p18 = scmp.ge.s32.totalorder %s17, 4
      %s27 = sphi 0, %s29
      %s30 = sphi 0, %s27
      %s31 = sphi 0, %s30
      %s47 = sphi 0, %s31
      %s51 = sphi 0, %s51
      %s53 = sphi 0, %s51
      %s54 = sphi 0, %s53
      %s68 = sphi 0, %s54
      %s72 = sphi 0, %s72
      %s74 = sphi 0, %s72
      %s75 = sphi 0, %s74
      %s89 = sphi 0, %s75
      %s93 = sphi 0, %s93
      %s95 = sphi 0, %s93
      %s96 = sphi 0, %s95
      %s110 = sphi 0, %s96
      %s114 = sphi 0, %s114
      %s116 = sphi 0, %s114
      %s117 = sphi 0, %s116
      %s131 = sphi 0, %s117
      %s135 = sphi 0, %s135
      %s137 = sphi 0, %s135
      %s138 = sphi 0, %s137
      %s152 = sphi 0, %s138
      %s156 = sphi 0, %s156
      %s158 = sphi 0, %s156
      %s159 = sphi 0, %s158
      %s173 = sphi 0, %s159
      %s179 = sphi 0, %s181
      %s182 = sphi 0, %s179
      %s183 = sphi 0, %s182
      %s199 = sphi 0, %s183
    $region4: #{tpu_custom_call.1} parent=1 // loop_header_branch
      %20 = sbr.rel (%p18) target = $region8
    $region5: #{tpu_custom_call.1} parent=1 // loop_body
      %s22 = ssub.s32 %s17, 1
      %s23 = ssub.s32 %s17, 2
      %s24 = sadd.s32 %s17, 1
      %s25 = ssub.s32 %s17, %s24
      %p26 = scmp.eq.s32.totalorder %s25, 0
      %s28 = sadd.s32 %s27, 1
      %s29 = scalar_select %p26, %s27, %s28
      %p32 = pneg %p26
      %p33 = scmp.eq.s32.totalorder %s17, 1
      %p34 = por %p32, %p33
      %p35 = scmp.ne.s32.totalorder %s27, %s30
      %p36 = scmp.eq.s32.totalorder %s17, 0
      %p37 = por %p35, %p36
      %p38 = scmp.ne.s32.totalorder %s27, %s30
      %p39 = scmp.eq.s32.totalorder %s22, 1
      %p40 = por %p38, %p39
      %p41 = scmp.ne.s32.totalorder %s30, %s31
      %p42 = scmp.eq.s32.totalorder %s22, 0
      %p43 = por %p41, %p42
      %p44 = scmp.ne.s32.totalorder %s30, %s31
      %p45 = scmp.eq.s32.totalorder %s23, 1
      %p46 = por %p44, %p45
      %p48 = scmp.ne.s32.totalorder %s31, %s47
      %p49 = scmp.eq.s32.totalorder %s23, 0
      %p50 = por %p48, %p49
      %s52 = sadd.s32 %s51, 1
      %p55 = scmp.eq.s32.totalorder %s17, 1
      %p56 = scmp.ne.s32.totalorder %s51, %s53
      %p57 = scmp.eq.s32.totalorder %s17, 0
      %p58 = por %p56, %p57
      %p59 = scmp.ne.s32.totalorder %s51, %s53
      %p60 = scmp.eq.s32.totalorder %s22, 1
      %p61 = por %p59, %p60
      %p62 = scmp.ne.s32.totalorder %s53, %s54
      %p63 = scmp.eq.s32.totalorder %s22, 0
      %p64 = por %p62, %p63
      %p65 = scmp.ne.s32.totalorder %s53, %s54
      %p66 = scmp.eq.s32.totalorder %s23, 1
      %p67 = por %p65, %p66
      %p69 = scmp.ne.s32.totalorder %s54, %s68
      %p70 = scmp.eq.s32.totalorder %s23, 0
      %p71 = por %p69, %p70
      %s73 = sadd.s32 %s72, 1
      %p76 = scmp.eq.s32.totalorder %s17, 1
      %p77 = scmp.ne.s32.totalorder %s72, %s74
      %p78 = scmp.eq.s32.totalorder %s17, 0
      %p79 = por %p77, %p78
      %p80 = scmp.ne.s32.totalorder %s72, %s74
      %p81 = scmp.eq.s32.totalorder %s22, 1
      %p82 = por %p80, %p81
      %p83 = scmp.ne.s32.totalorder %s74, %s75
      %p84 = scmp.eq.s32.totalorder %s22, 0
      %p85 = por %p83, %p84
      %p86 = scmp.ne.s32.totalorder %s74, %s75
      %p87 = scmp.eq.s32.totalorder %s23, 1
      %p88 = por %p86, %p87
      %p90 = scmp.ne.s32.totalorder %s75, %s89
      %p91 = scmp.eq.s32.totalorder %s23, 0
      %p92 = por %p90, %p91
      %s94 = sadd.s32 %s93, 1
      %p97 = scmp.eq.s32.totalorder %s17, 1
      %p98 = scmp.ne.s32.totalorder %s93, %s95
      %p99 = scmp.eq.s32.totalorder %s17, 0
      %p100 = por %p98, %p99
      %p101 = scmp.ne.s32.totalorder %s93, %s95
      %p102 = scmp.eq.s32.totalorder %s22, 1
      %p103 = por %p101, %p102
      %p104 = scmp.ne.s32.totalorder %s95, %s96
      %p105 = scmp.eq.s32.totalorder %s22, 0
      %p106 = por %p104, %p105
      %p107 = scmp.ne.s32.totalorder %s95, %s96
      %p108 = scmp.eq.s32.totalorder %s23, 1
      %p109 = por %p107, %p108
      %p111 = scmp.ne.s32.totalorder %s96, %s110
      %p112 = scmp.eq.s32.totalorder %s23, 0
      %p113 = por %p111, %p112
      %s115 = sadd.s32 %s114, 1
      %p118 = scmp.eq.s32.totalorder %s17, 1
      %p119 = scmp.ne.s32.totalorder %s114, %s116
      %p120 = scmp.eq.s32.totalorder %s17, 0
      %p121 = por %p119, %p120
      %p122 = scmp.ne.s32.totalorder %s114, %s116
      %p123 = scmp.eq.s32.totalorder %s22, 1
      %p124 = por %p122, %p123
      %p125 = scmp.ne.s32.totalorder %s116, %s117
      %p126 = scmp.eq.s32.totalorder %s22, 0
      %p127 = por %p125, %p126
      %p128 = scmp.ne.s32.totalorder %s116, %s117
      %p129 = scmp.eq.s32.totalorder %s23, 1
      %p130 = por %p128, %p129
      %p132 = scmp.ne.s32.totalorder %s117, %s131
      %p133 = scmp.eq.s32.totalorder %s23, 0
      %p134 = por %p132, %p133
      %s136 = sadd.s32 %s135, 1
      %p139 = scmp.eq.s32.totalorder %s17, 1
      %p140 = scmp.ne.s32.totalorder %s135, %s137
      %p141 = scmp.eq.s32.totalorder %s17, 0
      %p142 = por %p140, %p141
      %p143 = scmp.ne.s32.totalorder %s135, %s137
      %p144 = scmp.eq.s32.totalorder %s22, 1
      %p145 = por %p143, %p144
      %p146 = scmp.ne.s32.totalorder %s137, %s138
      %p147 = scmp.eq.s32.totalorder %s22, 0
      %p148 = por %p146, %p147
      %p149 = scmp.ne.s32.totalorder %s137, %s138
      %p150 = scmp.eq.s32.totalorder %s23, 1
      %p151 = por %p149, %p150
      %p153 = scmp.ne.s32.totalorder %s138, %s152
      %p154 = scmp.eq.s32.totalorder %s23, 0
      %p155 = por %p153, %p154
      %s157 = sadd.s32 %s156, 1
      %p160 = scmp.eq.s32.totalorder %s17, 1
      %p161 = scmp.ne.s32.totalorder %s156, %s158
      %p162 = scmp.eq.s32.totalorder %s17, 0
      %p163 = por %p161, %p162
      %p164 = scmp.ne.s32.totalorder %s156, %s158
      %p165 = scmp.eq.s32.totalorder %s22, 1
      %p166 = por %p164, %p165
      %p167 = scmp.ne.s32.totalorder %s158, %s159
      %p168 = scmp.eq.s32.totalorder %s22, 0
      %p169 = por %p167, %p168
      %p170 = scmp.ne.s32.totalorder %s158, %s159
      %p171 = scmp.eq.s32.totalorder %s23, 1
      %p172 = por %p170, %p171
      %p174 = scmp.ne.s32.totalorder %s159, %s173
      %p175 = scmp.eq.s32.totalorder %s23, 0
      %p176 = por %p174, %p175
      %s177 = ssub.s32 %s17, %s24
      %p178 = scmp.eq.s32.totalorder %s177, 0
      %s180 = sadd.s32 %s179, 1
      %s181 = scalar_select %p178, %s179, %s180
      %p184 = pneg %p178
      %p185 = scmp.eq.s32.totalorder %s17, 1
      %p186 = por %p184, %p185
      %p187 = scmp.ne.s32.totalorder %s179, %s182
      %p188 = scmp.eq.s32.totalorder %s17, 0
      %p189 = por %p187, %p188
      %p190 = scmp.ne.s32.totalorder %s179, %s182
      %p191 = scmp.eq.s32.totalorder %s22, 1
      %p192 = por %p190, %p191
      %p193 = scmp.ne.s32.totalorder %s182, %s183
      %p194 = scmp.eq.s32.totalorder %s22, 0
      %p195 = por %p193, %p194
      %p196 = scmp.ne.s32.totalorder %s182, %s183
      %p197 = scmp.eq.s32.totalorder %s23, 1
      %p198 = por %p196, %p197
      %p200 = scmp.ne.s32.totalorder %s183, %s199
      %p201 = scmp.eq.s32.totalorder %s23, 0
      %p202 = por %p200, %p201
      %p203 = scmp.le.s32.totalorder 1, %s17
      %p204 = scmp.lt.s32.totalorder %s17, 3
      %p205 = pnand %p203, %p204
      %p206 = pneg %p205
      // Predicated region
      $region9: #{tpu_custom_call.1} parent=5 // pred_check
        _
      $region10: #{tpu_custom_call.1} parent=5 // pred_check_branch
        %208 = sbr.rel (%p205) target = $region12
      $region11: #{tpu_custom_call.1} parent=5 // pred_region
        %s209 = ssub.s32 %s17, 1
        // Predicated region
        $region13: #{tpu_custom_call.1} parent=11 // pred_check
          %p210 = pneg %p64
        $region14: #{tpu_custom_call.1} parent=11 // pred_check_branch
          %212 = sbr.rel (%p210) target = $region16
        $region15: #{tpu_custom_call.1} parent=11 // pred_region
          _
        $region16: #{tpu_custom_call.1} parent=11 // pred_fallthru
          _
        // Predicated region
        $region17: #{tpu_custom_call.1} parent=11 // pred_check
          %p213 = pneg %p85
        $region18: #{tpu_custom_call.1} parent=11 // pred_check_branch
          %215 = sbr.rel (%p213) target = $region20
        $region19: #{tpu_custom_call.1} parent=11 // pred_region
          _
        $region20: #{tpu_custom_call.1} parent=11 // pred_fallthru
          _
        // Predicated region
        $region21: #{tpu_custom_call.1} parent=11 // pred_check
          %p216 = pneg %p106
        $region22: #{tpu_custom_call.1} parent=11 // pred_check_branch
          %218 = sbr.rel (%p216) target = $region24
        $region23: #{tpu_custom_call.1} parent=11 // pred_region
          %s220 = ssub.s32 14336, 14336
          %221 = vsyncadd [#allocation4], %s220
          %s222 = sshll.u32 [#allocation3], 4
          %s223 = int_to_ptr.vmem [resolvable:$true] %s222
          %228 = dma.hbm_to_vmem [thread:$0]  %s3, 14336, %s223, [#allocation4], 128, 128, 8
        $region24: #{tpu_custom_call.1} parent=11 // pred_fallthru
          _
        // Predicated region
        $region25: #{tpu_custom_call.1} parent=11 // pred_check
          %p229 = pneg %p127
        $region26: #{tpu_custom_call.1} parent=11 // pred_check_branch
          %231 = sbr.rel (%p229) target = $region28
        $region27: #{tpu_custom_call.1} parent=11 // pred_region
          _
        $region28: #{tpu_custom_call.1} parent=11 // pred_fallthru
          _
        // Predicated region
        $region29: #{tpu_custom_call.1} parent=11 // pred_check
          %p232 = pneg %p148
        $region30: #{tpu_custom_call.1} parent=11 // pred_check_branch
          %234 = sbr.rel (%p232) target = $region32
        $region31: #{tpu_custom_call.1} parent=11 // pred_region
          _
        $region32: #{tpu_custom_call.1} parent=11 // pred_fallthru
          _
        // Predicated region
        $region33: #{tpu_custom_call.1} parent=11 // pred_check
          %p235 = pneg %p169
        $region34: #{tpu_custom_call.1} parent=11 // pred_check_branch
          %237 = sbr.rel (%p235) target = $region36
        $region35: #{tpu_custom_call.1} parent=11 // pred_region
          _
        $region36: #{tpu_custom_call.1} parent=11 // pred_fallthru
          _
      $region12: #{tpu_custom_call.1} parent=5 // pred_fallthru
        _
      %p238 = scmp.lt.s32.totalorder %s17, 2
      // Predicated region
      $region37: #{tpu_custom_call.1} parent=5 // pred_check
        %p239 = pneg %p238
      $region38: #{tpu_custom_call.1} parent=5 // pred_check_branch
        %241 = sbr.rel (%p239) target = $region40
      $region39: #{tpu_custom_call.1} parent=5 // pred_region
        // Predicated region
        $region41: #{tpu_custom_call.1} parent=39 // pred_check
          %p242 = pneg %p37
        $region42: #{tpu_custom_call.1} parent=39 // pred_check_branch
          %244 = sbr.rel (%p242) target = $region44
        $region43: #{tpu_custom_call.1} parent=39 // pred_region
          %s245 = sand.u32 %s27, 1
          %s246 = sand.u32 %s27, 1
          %s247 = smul.addr %s246, 128
          %s248 = scalar_lea.vmem [#allocation2], %s247
          %s249 = smul.addr %s17, 8
          %s250 = scalar_lea.vmem %s0, %s249
          // Predicated region
          $region45: #{tpu_custom_call.1} parent=43 // pred_check
            _
          $region46: #{tpu_custom_call.1} parent=43 // pred_check_branch
            %252 = sbr.rel (0) target = $region48
          $region47: #{tpu_custom_call.1} parent=43 // pred_region
            // Predicated region
            $region49: #{tpu_custom_call.1} parent=47 // pred_check
              _
            $region50: #{tpu_custom_call.1} parent=47 // pred_check_branch
              %254 = sbr.rel (0) target = $region52
            $region51: #{tpu_custom_call.1} parent=47 // pred_region
              // Predicated region
              $region64: #{tpu_custom_call.1} parent=51 // pred_check
                _
              $region65: #{tpu_custom_call.1} parent=51 // pred_check_branch
                %299 = sbr.rel (0) target = $region67
              $region66: #{tpu_custom_call.1} parent=51 // pred_region
                loop: start=0, step=1, limit=1
                $region68: #{tpu_custom_call.1} parent=66 // loop_pre_header
                  _
                $region69: #{tpu_custom_call.1} parent=66 // loop_header
                  %s301 = sphi 0, %s305
                  %p302 = scmp.ge.s32.totalorder %s301, 1
                  %s306 = sphi %s250, %s250
                  %s307 = sphi %s248, %s248
                $region70: #{tpu_custom_call.1} parent=66 // loop_header_branch
                  %304 = sbr.rel (%p302) target = $region74
                $region71: #{tpu_custom_call.1} parent=66 // loop_body
                  %v308 = vld [vmem:[%s306] sm:$0xff]
                  %309 = vst [vmem:[%s307] sm:$0xff] %v308
                  %v310 = vld [vmem:[%s306 + $0x10] sm:$0xff]
                  %311 = vst [vmem:[%s307 + $0x8] sm:$0xff] %v310
                  %v312 = vld [vmem:[%s306 + $0x20] sm:$0xff]
                  %313 = vst [vmem:[%s307 + $0x10] sm:$0xff] %v312
                  %v314 = vld [vmem:[%s306 + $0x30] sm:$0xff]
                  %315 = vst [vmem:[%s307 + $0x18] sm:$0xff] %v314
                  %v316 = vld [vmem:[%s306 + $0x40] sm:$0xff]
                  %317 = vst [vmem:[%s307 + $0x20] sm:$0xff] %v316
                  %v318 = vld [vmem:[%s306 + $0x50] sm:$0xff]
                  %319 = vst [vmem:[%s307 + $0x28] sm:$0xff] %v318
                  %v320 = vld [vmem:[%s306 + $0x60] sm:$0xff]
                  %321 = vst [vmem:[%s307 + $0x30] sm:$0xff] %v320
                  %v322 = vld [vmem:[%s306 + $0x70] sm:$0xff]
                  %323 = vst [vmem:[%s307 + $0x38] sm:$0xff] %v322
                  %v324 = vld [vmem:[%s306 + $0x80] sm:$0xff]
                  %325 = vst [vmem:[%s307 + $0x40] sm:$0xff] %v324
                  %v326 = vld [vmem:[%s306 + $0x90] sm:$0xff]
                  %327 = vst [vmem:[%s307 + $0x48] sm:$0xff] %v326
                  %v328 = vld [vmem:[%s306 + $0xa0] sm:$0xff]
                  %329 = vst [vmem:[%s307 + $0x50] sm:$0xff] %v328
                  %v330 = vld [vmem:[%s306 + $0xb0] sm:$0xff]
                  %331 = vst [vmem:[%s307 + $0x58] sm:$0xff] %v330
                  %v332 = vld [vmem:[%s306 + $0xc0] sm:$0xff]
                  %333 = vst [vmem:[%s307 + $0x60] sm:$0xff] %v332
                  %v334 = vld [vmem:[%s306 + $0xd0] sm:$0xff]
                  %335 = vst [vmem:[%s307 + $0x68] sm:$0xff] %v334
                  %v336 = vld [vmem:[%s306 + $0xe0] sm:$0xff]
                  %337 = vst [vmem:[%s307 + $0x70] sm:$0xff] %v336
                  %v338 = vld [vmem:[%s306 + $0xf0] sm:$0xff]
                  %339 = vst [vmem:[%s307 + $0x78] sm:$0xff] %v338
                $region72: #{tpu_custom_call.1} parent=66 // loop_footer
                  %s305 = sadd.s32 1, %s301
                $region73: #{tpu_custom_call.1} parent=66 // loop_footer_branch
                  %300 = sbr.rel target = $region69
                $region74: #{tpu_custom_call.1} parent=66 // loop_exit
                  _
              $region67: #{tpu_custom_call.1} parent=51 // pred_fallthru
                _
              // Predicated region
              $region75: #{tpu_custom_call.1} parent=51 // pred_check
                _
              $region76: #{tpu_custom_call.1} parent=51 // pred_check_branch
                %341 = sbr.rel target = $region78
              $region77: #{tpu_custom_call.1} parent=51 // pred_region
                _
              $region78: #{tpu_custom_call.1} parent=51 // pred_fallthru
                _
            $region52: #{tpu_custom_call.1} parent=47 // pred_fallthru
              _
            // Predicated region
            $region53: #{tpu_custom_call.1} parent=47 // pred_check
              _
            $region54: #{tpu_custom_call.1} parent=47 // pred_check_branch
              %256 = sbr.rel target = $region56
            $region55: #{tpu_custom_call.1} parent=47 // pred_region
              loop: start=0, step=1, limit=1
              $region57: #{tpu_custom_call.1} parent=55 // loop_pre_header
                _
              $region58: #{tpu_custom_call.1} parent=55 // loop_header
                %s259 = sphi 0, %s263
                %p260 = scmp.ge.s32.totalorder %s259, 1
                %s264 = sphi %s250, %s250
                %s265 = sphi %s248, %s248
              $region59: #{tpu_custom_call.1} parent=55 // loop_header_branch
                %262 = sbr.rel (%p260) target = $region63
              $region60: #{tpu_custom_call.1} parent=55 // loop_body
                %v266 = vld [vmem:[%s264] sm:$0xff]
                %267 = vst [vmem:[%s265] sm:$0xff] %v266
                %v268 = vld [vmem:[%s264 + $0x10] sm:$0xff]
                %269 = vst [vmem:[%s265 + $0x8] sm:$0xff] %v268
                %v270 = vld [vmem:[%s264 + $0x20] sm:$0xff]
                %271 = vst [vmem:[%s265 + $0x10] sm:$0xff] %v270
                %v272 = vld [vmem:[%s264 + $0x30] sm:$0xff]
                %273 = vst [vmem:[%s265 + $0x18] sm:$0xff] %v272
                %v274 = vld [vmem:[%s264 + $0x40] sm:$0xff]
                %275 = vst [vmem:[%s265 + $0x20] sm:$0xff] %v274
                %v276 = vld [vmem:[%s264 + $0x50] sm:$0xff]
                %277 = vst [vmem:[%s265 + $0x28] sm:$0xff] %v276
                %v278 = vld [vmem:[%s264 + $0x60] sm:$0xff]
                %279 = vst [vmem:[%s265 + $0x30] sm:$0xff] %v278
                %v280 = vld [vmem:[%s264 + $0x70] sm:$0xff]
                %281 = vst [vmem:[%s265 + $0x38] sm:$0xff] %v280
                %v282 = vld [vmem:[%s264 + $0x80] sm:$0xff]
                %283 = vst [vmem:[%s265 + $0x40] sm:$0xff] %v282
                %v284 = vld [vmem:[%s264 + $0x90] sm:$0xff]
                %285 = vst [vmem:[%s265 + $0x48] sm:$0xff] %v284
                %v286 = vld [vmem:[%s264 + $0xa0] sm:$0xff]
                %287 = vst [vmem:[%s265 + $0x50] sm:$0xff] %v286
                %v288 = vld [vmem:[%s264 + $0xb0] sm:$0xff]
                %289 = vst [vmem:[%s265 + $0x58] sm:$0xff] %v288
                %v290 = vld [vmem:[%s264 + $0xc0] sm:$0xff]
                %291 = vst [vmem:[%s265 + $0x60] sm:$0xff] %v290
                %v292 = vld [vmem:[%s264 + $0xd0] sm:$0xff]
                %293 = vst [vmem:[%s265 + $0x68] sm:$0xff] %v292
                %v294 = vld [vmem:[%s264 + $0xe0] sm:$0xff]
                %295 = vst [vmem:[%s265 + $0x70] sm:$0xff] %v294
                %v296 = vld [vmem:[%s264 + $0xf0] sm:$0xff]
                %297 = vst [vmem:[%s265 + $0x78] sm:$0xff] %v296
              $region61: #{tpu_custom_call.1} parent=55 // loop_footer
                %s263 = sadd.s32 1, %s259
              $region62: #{tpu_custom_call.1} parent=55 // loop_footer_branch
                %258 = sbr.rel target = $region58
              $region63: #{tpu_custom_call.1} parent=55 // loop_exit
                _
            $region56: #{tpu_custom_call.1} parent=47 // pred_fallthru
              _
          $region48: #{tpu_custom_call.1} parent=43 // pred_fallthru
            _
          %342 = vnop
        $region44: #{tpu_custom_call.1} parent=39 // pred_fallthru
          _
      $region40: #{tpu_custom_call.1} parent=5 // pred_fallthru
        _
      %p343 = scmp.le.s32.totalorder 1, %s17
      %p344 = scmp.lt.s32.totalorder %s17, 3
      %p345 = pnand %p343, %p344
      %p346 = pneg %p345
      // Predicated region
      $region79: #{tpu_custom_call.1} parent=5 // pred_check
        _
      $region80: #{tpu_custom_call.1} parent=5 // pred_check_branch
        %348 = sbr.rel (%p345) target = $region82
      $region81: #{tpu_custom_call.1} parent=5 // pred_region
        %s349 = ssub.s32 %s17, 1
        %s350 = sand.u32 %s30, 1
        %s351 = sand.u32 %s30, 1
        %s352 = smul.addr %s351, 128
        %s353 = scalar_lea.vmem [#allocation2], %s352
        // Predicated region
        $region83: #{tpu_custom_call.1} parent=81 // pred_check
          %p354 = pneg %p43
        $region84: #{tpu_custom_call.1} parent=81 // pred_check_branch
          %356 = sbr.rel (%p354) target = $region86
        $region85: #{tpu_custom_call.1} parent=81 // pred_region
          _
        $region86: #{tpu_custom_call.1} parent=81 // pred_fallthru
          _
        // Predicated region
        $region87: #{tpu_custom_call.1} parent=81 // pred_check
          %p357 = pneg %p106
        $region88: #{tpu_custom_call.1} parent=81 // pred_check_branch
          %359 = sbr.rel (%p357) target = $region90
        $region89: #{tpu_custom_call.1} parent=81 // pred_region
          %360 = dma.done [#allocation4], 14336
        $region90: #{tpu_custom_call.1} parent=81 // pred_fallthru
          _
        %s361 = sand.u32 %s30, 1
        %s362 = sand.u32 %s30, 1
        %s363 = smul.addr %s362, 128
        %s364 = scalar_lea.vmem [#allocation2], %s363
        %p365 = pneg %p43
        %p366 = pneg %p40
        %p367 = pneg %p64
        %p368 = pneg %p61
        %p369 = pneg %p85
        %p370 = pneg %p82
        %p371 = pneg %p106
        %p372 = pneg %p103
        %p373 = pneg %p127
        %p374 = pneg %p124
        %p375 = pneg %p148
        %p376 = pneg %p145
        %p377 = pneg %p169
        %p378 = pneg %p166
        %p379 = pneg %p195
        %p380 = pneg %p192
        %s381 = sand.u32 %s182, 1
        %s382 = scalar_lea.sflag [#allocation5], %s381
        %s383 = sand.u32 %s182, 1
        %s384 = smul.addr %s383, 8
        %s385 = scalar_lea.vmem [#allocation6], %s384
        %v386 = vld [vmem:[%s353] sm:$0xff]
        %v387 = vld [vmem:[%s353 + $0x8] sm:$0xff]
        %v388 = vld [vmem:[%s353 + $0x10] sm:$0xff]
        %v389 = vld [vmem:[%s353 + $0x18] sm:$0xff]
        %v390 = vld [vmem:[%s353 + $0x20] sm:$0xff]
        %v391 = vld [vmem:[%s353 + $0x28] sm:$0xff]
        %v392 = vld [vmem:[%s353 + $0x30] sm:$0xff]
        %v393 = vld [vmem:[%s353 + $0x38] sm:$0xff]
        %v394 = vld [vmem:[%s353 + $0x40] sm:$0xff]
        %v395 = vld [vmem:[%s353 + $0x48] sm:$0xff]
        %v396 = vld [vmem:[%s353 + $0x50] sm:$0xff]
        %v397 = vld [vmem:[%s353 + $0x58] sm:$0xff]
        %v398 = vld [vmem:[%s353 + $0x60] sm:$0xff]
        %v399 = vld [vmem:[%s353 + $0x68] sm:$0xff]
        %v400 = vld [vmem:[%s353 + $0x70] sm:$0xff]
        %v401 = vld [vmem:[%s1] sm:$0xf]
        %v402 = vld [vmem:[%s1 + $0x4] sm:$0xf]
        %vm403 = vcmask 31744
        %v405 = vsel %vm403, %v387, 0
        %v408 = vsel %vm403, %v388, 0
        %v411 = vsel %vm403, %v389, 0
        %v414 = vsel %vm403, %v390, 0
        %v417 = vsel %vm403, %v391, 0
        %v420 = vsel %vm403, %v392, 0
        %v423 = vsel %vm403, %v393, 0
        %v426 = vsel %vm403, %v394, 0
        %v429 = vsel %vm403, %v395, 0
        %v432 = vsel %vm403, %v396, 0
        %v435 = vsel %vm403, %v397, 0
        %v438 = vsel %vm403, %v398, 0
        %v441 = vsel %vm403, %v399, 0
        %v444 = vsel %vm403, %v400, 0
        %vm446 = vcmask 1043456
        %v448 = vsel %vm446, %v402, 0
        %450 = vmatprep.subr.mxu0 0.0
        %451 = vmatpush1.msra.mxu0 %v448
        %452 = vmatprep.subr.mxu0 0.0
        %453 = vmatpush1.msra.mxu0 0.0
        %454 = vmatprep.subr.mxu0 0.0
        %455 = vmatpush1.msra.mxu0 0.0
        %456 = vmatprep.subr.mxu0 0.0
        %457 = vmatpush1.msra.mxu0 0.0
        %458 = vmatprep.subr.mxu0 0.0
        %459 = vmatpush1.msra.mxu0 0.0
        %460 = vmatprep.subr.mxu0 0.0
        %461 = vmatpush1.msra.mxu0 0.0
        %462 = vmatprep.subr.mxu0 0.0
        %463 = vmatpush1.msra.mxu0 0.0
        %464 = vmatprep.subr.mxu0 0.0
        %465 = vmatpush1.msra.mxu0 0.0
        %466 = vmatprep.subr.mxu0 0.0
        %467 = vmatpush1.msra.mxu0 0.0
        %468 = vmatprep.subr.mxu0 0.0
        %469 = vmatpush1.msra.mxu0 0.0
        %470 = vmatprep.subr.mxu0 0.0
        %471 = vmatpush1.msra.mxu0 0.0
        %472 = vmatprep.subr.mxu0 0.0
        %473 = vmatpush1.msra.mxu0 0.0
        %474 = vmatprep.subr.mxu0 0.0
        %475 = vmatpush1.msra.mxu0 0.0
        %476 = vmatprep.subr.mxu0 0.0
        %477 = vmatpush1.msra.mxu0 0.0
        %478 = vmatprep.subr.mxu0 0.0
        %479 = vmatpush1.msra.mxu0 0.0
        %480 = vmatprep.subr.mxu0 0.0
        %481 = vmatpush1.msra.mxu0 0.0
        %482 = vmatprep.subr.mxu0 0.0
        %483 = vmatpush1.msra.mxu0 0.0
        %484 = vmatprep.subr.mxu0 0.0
        %485 = vmatpush1.msra.mxu0 0.0
        %486 = vmatprep.subr.mxu0 0.0
        %487 = vmatpush1.msra.mxu0 0.0
        %488 = vmatprep.subr.mxu0 0.0
        %489 = vmatpush1.msra.mxu0 0.0
        %490 = vmatprep.subr.mxu0 0.0
        %491 = vmatpush1.msra.mxu0 0.0
        %492 = vmatprep.subr.mxu0 0.0
        %493 = vmatpush1.msra.mxu0 0.0
        %494 = vmatprep.subr.mxu0 0.0
        %495 = vmatpush1.msra.mxu0 0.0
        %496 = vmatprep.subr.mxu0 0.0
        %497 = vmatpush1.msra.mxu0 0.0
        %498 = vmatprep.subr.mxu0 0.0
        %499 = vmatpush1.msra.mxu0 0.0
        %500 = vmatprep.subr.mxu0 0.0
        %501 = vmatpush1.msra.mxu0 0.0
        %502 = vmatprep.subr.mxu0 0.0
        %503 = vmatpush1.msra.mxu0 0.0
        %504 = vmatprep.subr.mxu0 0.0
        %505 = vmatpush1.msra.mxu0 0.0
        %506 = vmatprep.subr.mxu0 0.0
        %507 = vmatpush1.msra.mxu0 0.0
        %508 = vmatprep.subr.mxu0 0.0
        %509 = vmatpush1.msra.mxu0 0.0
        %510 = vmatprep.subr.mxu0 0.0
        %511 = vmatpush1.msra.mxu0 0.0
        %512 = vmatprep.subr.mxu0 0.0
        %513 = vmatpush1.msra.mxu0 0.0
        %514 = vmatprep.mubr.f32.mxu0 0.0
        %515 = vmatmul.mubr.f32.gmra.mrb[0].mxu0 %v405
        %v516 = vpop.f32.mrb[0].mxu0
        %v517 = vadd.f32 0.0, %v516
        %v518 = vpop.f32.mrb[0].mxu0
        %519 = vmatprep.mubr.f32.mxu0 0.0
        %520 = vmatmul.mubr.f32.gmra.mrb[0].mxu0 %v408
        %v521 = vpop.f32.mrb[0].mxu0
        %v522 = vadd.f32 0.0, %v521
        %v523 = vpop.f32.mrb[0].mxu0
        %524 = vmatprep.mubr.f32.mxu0 0.0
        %525 = vmatmul.mubr.f32.gmra.mrb[0].mxu0 %v411
        %v526 = vpop.f32.mrb[0].mxu0
        %v527 = vadd.f32 0.0, %v526
        %v528 = vpop.f32.mrb[0].mxu0
        %529 = vmatprep.mubr.f32.mxu0 0.0
        %530 = vmatmul.mubr.f32.gmra.mrb[0].mxu0 %v414
        %v531 = vpop.f32.mrb[0].mxu0
        %v532 = vadd.f32 0.0, %v531
        %v533 = vpop.f32.mrb[0].mxu0
        %534 = vmatprep.mubr.f32.mxu0 0.0
        %535 = vmatmul.mubr.f32.gmra.mrb[0].mxu0 %v417
        %v536 = vpop.f32.mrb[0].mxu0
        %v537 = vadd.f32 0.0, %v536
        %v538 = vpop.f32.mrb[0].mxu0
        %539 = vmatprep.mubr.f32.mxu0 0.0
        %540 = vmatmul.mubr.f32.gmra.mrb[0].mxu0 %v420
        %v541 = vpop.f32.mrb[0].mxu0
        %v542 = vadd.f32 0.0, %v541
        %v543 = vpop.f32.mrb[0].mxu0
        %544 = vmatprep.mubr.f32.mxu0 0.0
        %545 = vmatmul.mubr.f32.gmra.mrb[0].mxu0 %v423
        %v546 = vpop.f32.mrb[0].mxu0
        %v547 = vadd.f32 0.0, %v546
        %v548 = vpop.f32.mrb[0].mxu0
        %549 = vmatprep.mubr.f32.mxu0 0.0
        %550 = vmatmul.mubr.f32.gmra.mrb[0].mxu0 %v426
        %v551 = vpop.f32.mrb[0].mxu0
        %v552 = vadd.f32 0.0, %v551
        %v553 = vpop.f32.mrb[0].mxu0
        %554 = vmatprep.mubr.f32.mxu0 0.0
        %555 = vmatmul.mubr.f32.gmra.mrb[0].mxu0 %v429
        %v556 = vpop.f32.mrb[0].mxu0
        %v557 = vadd.f32 0.0, %v556
        %v558 = vpop.f32.mrb[0].mxu0
        %559 = vmatprep.mubr.f32.mxu0 0.0
        %560 = vmatmul.mubr.f32.gmra.mrb[0].mxu0 %v432
        %v561 = vpop.f32.mrb[0].mxu0
        %v562 = vadd.f32 0.0, %v561
        %v563 = vpop.f32.mrb[0].mxu0
        %564 = vmatprep.mubr.f32.mxu0 0.0
        %565 = vmatmul.mubr.f32.gmra.mrb[0].mxu0 %v435
        %v566 = vpop.f32.mrb[0].mxu0
        %v567 = vadd.f32 0.0, %v566
        %v568 = vpop.f32.mrb[0].mxu0
        %569 = vmatprep.mubr.f32.mxu0 0.0
        %570 = vmatmul.mubr.f32.gmra.mrb[0].mxu0 %v438
        %v571 = vpop.f32.mrb[0].mxu0
        %v572 = vadd.f32 0.0, %v571
        %v573 = vpop.f32.mrb[0].mxu0
        %574 = vmatprep.mubr.f32.mxu0 0.0
        %575 = vmatmul.mubr.f32.gmra.mrb[0].mxu0 %v441
        %v576 = vpop.f32.mrb[0].mxu0
        %v577 = vadd.f32 0.0, %v576
        %v578 = vpop.f32.mrb[0].mxu0
        %579 = vmatprep.mubr.f32.mxu0 0.0
        %580 = vmatmul.mubr.f32.gmra.mrb[0].mxu0 %v444
        %v581 = vpop.f32.mrb[0].mxu0
        %v582 = vadd.f32 0.0, %v581
        %v583 = vpop.f32.mrb[0].mxu0
        %584 = vdwg.mxu0
        %v586 = vsel %vm403, %v386, 0
        %v589 = vsel %vm446, %v401, 0
        %591 = vmatprep.subr.mxu0 0.0
        %592 = vmatpush1.msra.mxu0 %v589
        %593 = vmatprep.subr.mxu0 0.0
        %594 = vmatpush1.msra.mxu0 0.0
        %595 = vmatprep.subr.mxu0 0.0
        %596 = vmatpush1.msra.mxu0 0.0
        %597 = vmatprep.subr.mxu0 0.0
        %598 = vmatpush1.msra.mxu0 0.0
        %599 = vmatprep.subr.mxu0 0.0
        %600 = vmatpush1.msra.mxu0 0.0
        %601 = vmatprep.subr.mxu0 0.0
        %602 = vmatpush1.msra.mxu0 0.0
        %603 = vmatprep.subr.mxu0 0.0
        %604 = vmatpush1.msra.mxu0 0.0
        %605 = vmatprep.subr.mxu0 0.0
        %606 = vmatpush1.msra.mxu0 0.0
        %607 = vmatprep.subr.mxu0 0.0
        %608 = vmatpush1.msra.mxu0 0.0
        %609 = vmatprep.subr.mxu0 0.0
        %610 = vmatpush1.msra.mxu0 0.0
        %611 = vmatprep.subr.mxu0 0.0
        %612 = vmatpush1.msra.mxu0 0.0
        %613 = vmatprep.subr.mxu0 0.0
        %614 = vmatpush1.msra.mxu0 0.0
        %615 = vmatprep.subr.mxu0 0.0
        %616 = vmatpush1.msra.mxu0 0.0
        %617 = vmatprep.subr.mxu0 0.0
        %618 = vmatpush1.msra.mxu0 0.0
        %619 = vmatprep.subr.mxu0 0.0
        %620 = vmatpush1.msra.mxu0 0.0
        %621 = vmatprep.subr.mxu0 0.0
        %622 = vmatpush1.msra.mxu0 0.0
        %623 = vmatprep.subr.mxu0 0.0
        %624 = vmatpush1.msra.mxu0 0.0
        %625 = vmatprep.subr.mxu0 0.0
        %626 = vmatpush1.msra.mxu0 0.0
        %627 = vmatprep.subr.mxu0 0.0
        %628 = vmatpush1.msra.mxu0 0.0
        %629 = vmatprep.subr.mxu0 0.0
        %630 = vmatpush1.msra.mxu0 0.0
        %631 = vmatprep.subr.mxu0 0.0
        %632 = vmatpush1.msra.mxu0 0.0
        %633 = vmatprep.subr.mxu0 0.0
        %634 = vmatpush1.msra.mxu0 0.0
        %635 = vmatprep.subr.mxu0 0.0
        %636 = vmatpush1.msra.mxu0 0.0
        %637 = vmatprep.subr.mxu0 0.0
        %638 = vmatpush1.msra.mxu0 0.0
        %639 = vmatprep.subr.mxu0 0.0
        %640 = vmatpush1.msra.mxu0 0.0
        %641 = vmatprep.subr.mxu0 0.0
        %642 = vmatpush1.msra.mxu0 0.0
        %643 = vmatprep.subr.mxu0 0.0
        %644 = vmatpush1.msra.mxu0 0.0
        %645 = vmatprep.subr.mxu0 0.0
        %646 = vmatpush1.msra.mxu0 0.0
        %647 = vmatprep.subr.mxu0 0.0
        %648 = vmatpush1.msra.mxu0 0.0
        %649 = vmatprep.subr.mxu0 0.0
        %650 = vmatpush1.msra.mxu0 0.0
        %651 = vmatprep.subr.mxu0 0.0
        %652 = vmatpush1.msra.mxu0 0.0
        %653 = vmatprep.subr.mxu0 0.0
        %654 = vmatpush1.msra.mxu0 0.0
        %655 = vmatprep.mubr.f32.mxu0 0.0
        %656 = vmatmul.mubr.f32.gmra.mrb[0].mxu0 %v586
        %v657 = vpop.f32.mrb[0].mxu0
        %v658 = vadd.f32 %v517, %v657
        %v659 = vpop.f32.mrb[0].mxu0
        %660 = vmatprep.mubr.f32.mxu0 0.0
        %661 = vmatmul.mubr.f32.gmra.mrb[0].mxu0 %v405
        %v662 = vpop.f32.mrb[0].mxu0
        %v663 = vadd.f32 %v522, %v662
        %v664 = vpop.f32.mrb[0].mxu0
        %665 = vmatprep.mubr.f32.mxu0 0.0
        %666 = vmatmul.mubr.f32.gmra.mrb[0].mxu0 %v408
        %v667 = vpop.f32.mrb[0].mxu0
        %v668 = vadd.f32 %v527, %v667
        %v669 = vpop.f32.mrb[0].mxu0
        %670 = vmatprep.mubr.f32.mxu0 0.0
        %671 = vmatmul.mubr.f32.gmra.mrb[0].mxu0 %v411
        %v672 = vpop.f32.mrb[0].mxu0
        %v673 = vadd.f32 %v532, %v672
        %v674 = vpop.f32.mrb[0].mxu0
        %675 = vmatprep.mubr.f32.mxu0 0.0
        %676 = vmatmul.mubr.f32.gmra.mrb[0].mxu0 %v414
        %v677 = vpop.f32.mrb[0].mxu0
        %v678 = vadd.f32 %v537, %v677
        %v679 = vpop.f32.mrb[0].mxu0
        %680 = vmatprep.mubr.f32.mxu0 0.0
        %681 = vmatmul.mubr.f32.gmra.mrb[0].mxu0 %v417
        %v682 = vpop.f32.mrb[0].mxu0
        %v683 = vadd.f32 %v542, %v682
        %v684 = vpop.f32.mrb[0].mxu0
        %685 = vmatprep.mubr.f32.mxu0 0.0
        %686 = vmatmul.mubr.f32.gmra.mrb[0].mxu0 %v420
        %v687 = vpop.f32.mrb[0].mxu0
        %v688 = vadd.f32 %v547, %v687
        %v689 = vpop.f32.mrb[0].mxu0
        %690 = vmatprep.mubr.f32.mxu0 0.0
        %691 = vmatmul.mubr.f32.gmra.mrb[0].mxu0 %v423
        %v692 = vpop.f32.mrb[0].mxu0
        %v693 = vadd.f32 %v552, %v692
        %v694 = vpop.f32.mrb[0].mxu0
        %695 = vmatprep.mubr.f32.mxu0 0.0
        %696 = vmatmul.mubr.f32.gmra.mrb[0].mxu0 %v426
        %v697 = vpop.f32.mrb[0].mxu0
        %v698 = vadd.f32 %v557, %v697
        %v699 = vpop.f32.mrb[0].mxu0
        %700 = vmatprep.mubr.f32.mxu0 0.0
        %701 = vmatmul.mubr.f32.gmra.mrb[0].mxu0 %v429
        %v702 = vpop.f32.mrb[0].mxu0
        %v703 = vadd.f32 %v562, %v702
        %v704 = vpop.f32.mrb[0].mxu0
        %705 = vmatprep.mubr.f32.mxu0 0.0
        %706 = vmatmul.mubr.f32.gmra.mrb[0].mxu0 %v432
        %v707 = vpop.f32.mrb[0].mxu0
        %v708 = vadd.f32 %v567, %v707
        %v709 = vpop.f32.mrb[0].mxu0
        %710 = vmatprep.mubr.f32.mxu0 0.0
        %711 = vmatmul.mubr.f32.gmra.mrb[0].mxu0 %v435
        %v712 = vpop.f32.mrb[0].mxu0
        %v713 = vadd.f32 %v572, %v712
        %v714 = vpop.f32.mrb[0].mxu0
        %715 = vmatprep.mubr.f32.mxu0 0.0
        %716 = vmatmul.mubr.f32.gmra.mrb[0].mxu0 %v438
        %v717 = vpop.f32.mrb[0].mxu0
        %v718 = vadd.f32 %v577, %v717
        %v719 = vpop.f32.mrb[0].mxu0
        %720 = vmatprep.mubr.f32.mxu0 0.0
        %721 = vmatmul.mubr.f32.gmra.mrb[0].mxu0 %v441
        %v722 = vpop.f32.mrb[0].mxu0
        %v723 = vadd.f32 %v582, %v722
        %v724 = vpop.f32.mrb[0].mxu0
        %725 = vdwg.mxu0
        %v726 = vld [vmem:[%s2] sm:$0x1]
        %v728 = vlaneseq
        %v729 = vshrl.u32 %v728, 7
        %v730 = vsub.s32 0, %v729
        %v731 = vrot.slane %v726, %v730
        %v733 = vadd.f32 %v658, %v731
        %v734 = vadd.f32 %v663, %v731
        %v735 = vadd.f32 %v668, %v731
        %v736 = vadd.f32 %v673, %v731
        %v737 = vadd.f32 %v678, %v731
        %v738 = vadd.f32 %v683, %v731
        %v739 = vadd.f32 %v688, %v731
        %v740 = vadd.f32 %v693, %v731
        %v741 = vadd.f32 %v698, %v731
        %v742 = vadd.f32 %v703, %v731
        %v743 = vadd.f32 %v708, %v731
        %v744 = vadd.f32 %v713, %v731
        %v745 = vadd.f32 %v718, %v731
        %v746 = vadd.f32 %v723, %v731
        %v747 = vmax.f32 %v733, 0.0
        %v748 = vmax.f32 %v734, 0.0
        %v749 = vmax.f32 %v735, 0.0
        %v750 = vmax.f32 %v736, 0.0
        %v751 = vmax.f32 %v737, 0.0
        %v752 = vmax.f32 %v738, 0.0
        %v753 = vmax.f32 %v739, 0.0
        %v754 = vmax.f32 %v740, 0.0
        %v755 = vmax.f32 %v741, 0.0
        %v756 = vmax.f32 %v742, 0.0
        %v757 = vmax.f32 %v743, 0.0
        %v758 = vmax.f32 %v744, 0.0
        %v759 = vmax.f32 %v745, 0.0
        %v760 = vmax.f32 %v746, 0.0
        %v761 = vmax.f32 %v747, %v748
        %v762 = vmax.f32 %v749, %v750
        %v763 = vmax.f32 %v751, %v752
        %v764 = vmax.f32 %v753, %v754
        %v765 = vmax.f32 %v755, %v756
        %v766 = vmax.f32 %v757, %v758
        %v767 = vmax.f32 %v759, %v760
        %v768 = vld [vmem:[#allocation3] sm:$0xff]
        %v769 = vld [vmem:[#allocation3 + $0x8] sm:$0xff]
        %v770 = vld [vmem:[#allocation3 + $0x10] sm:$0xff]
        %v771 = vld [vmem:[#allocation3 + $0x18] sm:$0xff]
        %v772 = vld [vmem:[#allocation3 + $0x20] sm:$0xff]
        %v773 = vld [vmem:[#allocation3 + $0x28] sm:$0xff]
        %v774 = vld [vmem:[#allocation3 + $0x30] sm:$0xff]
        %v775 = vld [vmem:[#allocation3 + $0x38] sm:$0xff]
        %v776 = vld [vmem:[#allocation3 + $0x40] sm:$0xff]
        %v777 = vld [vmem:[#allocation3 + $0x48] sm:$0xff]
        %v778 = vld [vmem:[#allocation3 + $0x50] sm:$0xff]
        %v779 = vld [vmem:[#allocation3 + $0x58] sm:$0xff]
        %v780 = vld [vmem:[#allocation3 + $0x60] sm:$0xff]
        %v781 = vld [vmem:[#allocation3 + $0x68] sm:$0xff]
        %v782 = vld [vmem:[#allocation3 + $0x70] sm:$0xff]
        %v783 = vld [vmem:[#allocation3 + $0x78] sm:$0xff]
        %v784 = vld [vmem:[#allocation3 + $0x80] sm:$0xff]
        %v785 = vld [vmem:[#allocation3 + $0x88] sm:$0xff]
        %v786 = vld [vmem:[#allocation3 + $0x90] sm:$0xff]
        %v787 = vld [vmem:[#allocation3 + $0x98] sm:$0xff]
        %v788 = vld [vmem:[#allocation3 + $0xa0] sm:$0xff]
        %v789 = vld [vmem:[#allocation3 + $0xa8] sm:$0xff]
        %v790 = vld [vmem:[#allocation3 + $0xb0] sm:$0xff]
        %v791 = vld [vmem:[#allocation3 + $0xb8] sm:$0xff]
        %v792 = vld [vmem:[#allocation3 + $0xc0] sm:$0xff]
        %v793 = vld [vmem:[#allocation3 + $0xc8] sm:$0xff]
        %v794 = vld [vmem:[#allocation3 + $0xd0] sm:$0xff]
        %v795 = vld [vmem:[#allocation3 + $0xd8] sm:$0xff]
        %v796 = vld [vmem:[#allocation3 + $0xe0] sm:$0xff]
        %v797 = vld [vmem:[#allocation3 + $0xe8] sm:$0xff]
        %v798 = vld [vmem:[#allocation3 + $0xf0] sm:$0xff]
        %v799 = vld [vmem:[#allocation3 + $0xf8] sm:$0xff]
        %v800 = vld [vmem:[#allocation3 + $0x100] sm:$0xff]
        %v801 = vld [vmem:[#allocation3 + $0x108] sm:$0xff]
        %v802 = vld [vmem:[#allocation3 + $0x110] sm:$0xff]
        %v803 = vld [vmem:[#allocation3 + $0x118] sm:$0xff]
        %v804 = vld [vmem:[#allocation3 + $0x120] sm:$0xff]
        %v805 = vld [vmem:[#allocation3 + $0x128] sm:$0xff]
        %v806 = vld [vmem:[#allocation3 + $0x130] sm:$0xff]
        %v807 = vld [vmem:[#allocation3 + $0x138] sm:$0xff]
        %v808 = vld [vmem:[#allocation3 + $0x140] sm:$0xff]
        %v809 = vld [vmem:[#allocation3 + $0x148] sm:$0xff]
        %v810 = vld [vmem:[#allocation3 + $0x150] sm:$0xff]
        %v811 = vld [vmem:[#allocation3 + $0x158] sm:$0xff]
        %v812 = vld [vmem:[#allocation3 + $0x160] sm:$0xff]
        %v813 = vld [vmem:[#allocation3 + $0x168] sm:$0xff]
        %v814 = vld [vmem:[#allocation3 + $0x170] sm:$0xff]
        %v815 = vld [vmem:[#allocation3 + $0x178] sm:$0xff]
        %v816 = vld [vmem:[#allocation3 + $0x180] sm:$0xff]
        %v817 = vld [vmem:[#allocation3 + $0x188] sm:$0xff]
        %v818 = vld [vmem:[#allocation3 + $0x190] sm:$0xff]
        %v819 = vld [vmem:[#allocation3 + $0x198] sm:$0xff]
        %v820 = vld [vmem:[#allocation3 + $0x1a0] sm:$0xff]
        %v821 = vld [vmem:[#allocation3 + $0x1a8] sm:$0xff]
        %v822 = vld [vmem:[#allocation3 + $0x1b0] sm:$0xff]
        %v823 = vld [vmem:[#allocation3 + $0x1b8] sm:$0xff]
        %v824 = vld [vmem:[#allocation3 + $0x1c0] sm:$0xff]
        %v825 = vld [vmem:[#allocation3 + $0x1c8] sm:$0xff]
        %v826 = vld [vmem:[#allocation3 + $0x1d0] sm:$0xff]
        %v827 = vld [vmem:[#allocation3 + $0x1d8] sm:$0xff]
        %v828 = vld [vmem:[#allocation3 + $0x1e0] sm:$0xff]
        %v829 = vld [vmem:[#allocation3 + $0x1e8] sm:$0xff]
        %v830 = vld [vmem:[#allocation3 + $0x1f0] sm:$0xff]
        %v831 = vld [vmem:[#allocation3 + $0x1f8] sm:$0xff]
        %v832 = vld [vmem:[#allocation3 + $0x200] sm:$0xff]
        %v833 = vld [vmem:[#allocation3 + $0x208] sm:$0xff]
        %v834 = vld [vmem:[#allocation3 + $0x210] sm:$0xff]
        %v835 = vld [vmem:[#allocation3 + $0x218] sm:$0xff]
        %v836 = vld [vmem:[#allocation3 + $0x220] sm:$0xff]
        %v837 = vld [vmem:[#allocation3 + $0x228] sm:$0xff]
        %v838 = vld [vmem:[#allocation3 + $0x230] sm:$0xff]
        %v839 = vld [vmem:[#allocation3 + $0x238] sm:$0xff]
        %v840 = vld [vmem:[#allocation3 + $0x240] sm:$0xff]
        %v841 = vld [vmem:[#allocation3 + $0x248] sm:$0xff]
        %v842 = vld [vmem:[#allocation3 + $0x250] sm:$0xff]
        %v843 = vld [vmem:[#allocation3 + $0x258] sm:$0xff]
        %v844 = vld [vmem:[#allocation3 + $0x260] sm:$0xff]
        %v845 = vld [vmem:[#allocation3 + $0x268] sm:$0xff]
        %v846 = vld [vmem:[#allocation3 + $0x270] sm:$0xff]
        %v847 = vld [vmem:[#allocation3 + $0x278] sm:$0xff]
        %v848 = vld [vmem:[#allocation3 + $0x280] sm:$0xff]
        %v849 = vld [vmem:[#allocation3 + $0x288] sm:$0xff]
        %v850 = vld [vmem:[#allocation3 + $0x290] sm:$0xff]
        %v851 = vld [vmem:[#allocation3 + $0x298] sm:$0xff]
        %v852 = vld [vmem:[#allocation3 + $0x2a0] sm:$0xff]
        %v853 = vld [vmem:[#allocation3 + $0x2a8] sm:$0xff]
        %v854 = vld [vmem:[#allocation3 + $0x2b0] sm:$0xff]
        %v855 = vld [vmem:[#allocation3 + $0x2b8] sm:$0xff]
        %v856 = vld [vmem:[#allocation3 + $0x2c0] sm:$0xff]
        %v857 = vld [vmem:[#allocation3 + $0x2c8] sm:$0xff]
        %v858 = vld [vmem:[#allocation3 + $0x2d0] sm:$0xff]
        %v859 = vld [vmem:[#allocation3 + $0x2d8] sm:$0xff]
        %v860 = vld [vmem:[#allocation3 + $0x2e0] sm:$0xff]
        %v861 = vld [vmem:[#allocation3 + $0x2e8] sm:$0xff]
        %v862 = vld [vmem:[#allocation3 + $0x2f0] sm:$0xff]
        %v863 = vld [vmem:[#allocation3 + $0x2f8] sm:$0xff]
        %v864 = vld [vmem:[#allocation3 + $0x300] sm:$0xff]
        %v865 = vld [vmem:[#allocation3 + $0x308] sm:$0xff]
        %v866 = vld [vmem:[#allocation3 + $0x310] sm:$0xff]
        %v867 = vld [vmem:[#allocation3 + $0x318] sm:$0xff]
        %v868 = vld [vmem:[#allocation3 + $0x320] sm:$0xff]
        %v869 = vld [vmem:[#allocation3 + $0x328] sm:$0xff]
        %v870 = vld [vmem:[#allocation3 + $0x330] sm:$0xff]
        %v871 = vld [vmem:[#allocation3 + $0x338] sm:$0xff]
        %v872 = vld [vmem:[#allocation3 + $0x340] sm:$0xff]
        %v873 = vld [vmem:[#allocation3 + $0x348] sm:$0xff]
        %v874 = vld [vmem:[#allocation3 + $0x350] sm:$0xff]
        %v875 = vld [vmem:[#allocation3 + $0x358] sm:$0xff]
        %v876 = vld [vmem:[#allocation3 + $0x360] sm:$0xff]
        %v877 = vld [vmem:[#allocation3 + $0x368] sm:$0xff]
        %v878 = vld [vmem:[#allocation3 + $0x370] sm:$0xff]
        %v879 = vld [vmem:[#allocation3 + $0x378] sm:$0xff]
        %v880 = vld [vmem:[%s4] sm:$0x1]
        %v882 = vlaneseq
        %v883 = vshrl.u32 %v882, 7
        %v884 = vsub.s32 0, %v883
        %v885 = vrot.slane %v880, %v884
        %887 = vmatprep.subr.mxu0 0.0
        %888 = vmatpush1.msra.mxu0 %v768
        %889 = vmatprep.subr.mxu0 0.0
        %890 = vmatpush1.msra.mxu0 %v769
        %891 = vmatprep.subr.mxu0 0.0
        %892 = vmatpush1.msra.mxu0 %v770
        %893 = vmatprep.subr.mxu0 0.0
        %894 = vmatpush1.msra.mxu0 %v771
        %895 = vmatprep.subr.mxu0 0.0
        %896 = vmatpush1.msra.mxu0 %v772
        %897 = vmatprep.subr.mxu0 0.0
        %898 = vmatpush1.msra.mxu0 %v773
        %899 = vmatprep.subr.mxu0 0.0
        %900 = vmatpush1.msra.mxu0 %v774
        %901 = vmatprep.subr.mxu0 0.0
        %902 = vmatpush1.msra.mxu0 %v775
        %903 = vmatprep.subr.mxu0 0.0
        %904 = vmatpush1.msra.mxu0 %v776
        %905 = vmatprep.subr.mxu0 0.0
        %906 = vmatpush1.msra.mxu0 %v777
        %907 = vmatprep.subr.mxu0 0.0
        %908 = vmatpush1.msra.mxu0 %v778
        %909 = vmatprep.subr.mxu0 0.0
        %910 = vmatpush1.msra.mxu0 %v779
        %911 = vmatprep.subr.mxu0 0.0
        %912 = vmatpush1.msra.mxu0 %v780
        %913 = vmatprep.subr.mxu0 0.0
        %914 = vmatpush1.msra.mxu0 %v781
        %915 = vmatprep.subr.mxu0 0.0
        %916 = vmatpush1.msra.mxu0 %v782
        %917 = vmatprep.subr.mxu0 0.0
        %918 = vmatpush1.msra.mxu0 %v783
        %919 = vmatprep.subr.mxu0 0.0
        %920 = vmatpush1.msra.mxu0 %v784
        %921 = vmatprep.subr.mxu0 0.0
        %922 = vmatpush1.msra.mxu0 %v785
        %923 = vmatprep.subr.mxu0 0.0
        %924 = vmatpush1.msra.mxu0 %v786
        %925 = vmatprep.subr.mxu0 0.0
        %926 = vmatpush1.msra.mxu0 %v787
        %927 = vmatprep.subr.mxu0 0.0
        %928 = vmatpush1.msra.mxu0 %v788
        %929 = vmatprep.subr.mxu0 0.0
        %930 = vmatpush1.msra.mxu0 %v789
        %931 = vmatprep.subr.mxu0 0.0
        %932 = vmatpush1.msra.mxu0 %v790
        %933 = vmatprep.subr.mxu0 0.0
        %934 = vmatpush1.msra.mxu0 %v791
        %935 = vmatprep.subr.mxu0 0.0
        %936 = vmatpush1.msra.mxu0 %v792
        %937 = vmatprep.subr.mxu0 0.0
        %938 = vmatpush1.msra.mxu0 %v793
        %939 = vmatprep.subr.mxu0 0.0
        %940 = vmatpush1.msra.mxu0 %v794
        %941 = vmatprep.subr.mxu0 0.0
        %942 = vmatpush1.msra.mxu0 %v795
        %943 = vmatprep.subr.mxu0 0.0
        %944 = vmatpush1.msra.mxu0 %v796
        %945 = vmatprep.subr.mxu0 0.0
        %946 = vmatpush1.msra.mxu0 %v797
        %947 = vmatprep.subr.mxu0 0.0
        %948 = vmatpush1.msra.mxu0 %v798
        %949 = vmatprep.subr.mxu0 0.0
        %950 = vmatpush1.msra.mxu0 %v799
        %951 = vmatprep.mubr.f32.mxu0 %v762
        %952 = vmatmul.mubr.f32.gmra.mrb[0].mxu0 %v761
        %v953 = vpop.f32.mrb[0].mxu0
        %v954 = vadd.f32 %v885, %v953
        %v955 = vpop.f32.mrb[0].mxu0
        %956 = vdwg.mxu0
        %957 = vmatprep.subr.mxu0 0.0
        %958 = vmatpush1.msra.mxu0 %v800
        %959 = vmatprep.subr.mxu0 0.0
        %960 = vmatpush1.msra.mxu0 %v801
        %961 = vmatprep.subr.mxu0 0.0
        %962 = vmatpush1.msra.mxu0 %v802
        %963 = vmatprep.subr.mxu0 0.0
        %964 = vmatpush1.msra.mxu0 %v803
        %965 = vmatprep.subr.mxu0 0.0
        %966 = vmatpush1.msra.mxu0 %v804
        %967 = vmatprep.subr.mxu0 0.0
        %968 = vmatpush1.msra.mxu0 %v805
        %969 = vmatprep.subr.mxu0 0.0
        %970 = vmatpush1.msra.mxu0 %v806
        %971 = vmatprep.subr.mxu0 0.0
        %972 = vmatpush1.msra.mxu0 %v807
        %973 = vmatprep.subr.mxu0 0.0
        %974 = vmatpush1.msra.mxu0 %v808
        %975 = vmatprep.subr.mxu0 0.0
        %976 = vmatpush1.msra.mxu0 %v809
        %977 = vmatprep.subr.mxu0 0.0
        %978 = vmatpush1.msra.mxu0 %v810
        %979 = vmatprep.subr.mxu0 0.0
        %980 = vmatpush1.msra.mxu0 %v811
        %981 = vmatprep.subr.mxu0 0.0
        %982 = vmatpush1.msra.mxu0 %v812
        %983 = vmatprep.subr.mxu0 0.0
        %984 = vmatpush1.msra.mxu0 %v813
        %985 = vmatprep.subr.mxu0 0.0
        %986 = vmatpush1.msra.mxu0 %v814
        %987 = vmatprep.subr.mxu0 0.0
        %988 = vmatpush1.msra.mxu0 %v815
        %989 = vmatprep.subr.mxu0 0.0
        %990 = vmatpush1.msra.mxu0 %v816
        %991 = vmatprep.subr.mxu0 0.0
        %992 = vmatpush1.msra.mxu0 %v817
        %993 = vmatprep.subr.mxu0 0.0
        %994 = vmatpush1.msra.mxu0 %v818
        %995 = vmatprep.subr.mxu0 0.0
        %996 = vmatpush1.msra.mxu0 %v819
        %997 = vmatprep.subr.mxu0 0.0
        %998 = vmatpush1.msra.mxu0 %v820
        %999 = vmatprep.subr.mxu0 0.0
        %1000 = vmatpush1.msra.mxu0 %v821
        %1001 = vmatprep.subr.mxu0 0.0
        %1002 = vmatpush1.msra.mxu0 %v822
        %1003 = vmatprep.subr.mxu0 0.0
        %1004 = vmatpush1.msra.mxu0 %v823
        %1005 = vmatprep.subr.mxu0 0.0
        %1006 = vmatpush1.msra.mxu0 %v824
        %1007 = vmatprep.subr.mxu0 0.0
        %1008 = vmatpush1.msra.mxu0 %v825
        %1009 = vmatprep.subr.mxu0 0.0
        %1010 = vmatpush1.msra.mxu0 %v826
        %1011 = vmatprep.subr.mxu0 0.0
        %1012 = vmatpush1.msra.mxu0 %v827
        %1013 = vmatprep.subr.mxu0 0.0
        %1014 = vmatpush1.msra.mxu0 %v828
        %1015 = vmatprep.subr.mxu0 0.0
        %1016 = vmatpush1.msra.mxu0 %v829
        %1017 = vmatprep.subr.mxu0 0.0
        %1018 = vmatpush1.msra.mxu0 %v830
        %1019 = vmatprep.subr.mxu0 0.0
        %1020 = vmatpush1.msra.mxu0 %v831
        %1021 = vmatprep.mubr.f32.mxu0 %v764
        %1022 = vmatmul.mubr.f32.gmra.mrb[0].mxu0 %v763
        %v1023 = vpop.f32.mrb[0].mxu0
        %v1024 = vadd.f32 %v954, %v1023
        %v1025 = vpop.f32.mrb[0].mxu0
        %1026 = vdwg.mxu0
        %1027 = vmatprep.subr.mxu0 0.0
        %1028 = vmatpush1.msra.mxu0 %v832
        %1029 = vmatprep.subr.mxu0 0.0
        %1030 = vmatpush1.msra.mxu0 %v833
        %1031 = vmatprep.subr.mxu0 0.0
        %1032 = vmatpush1.msra.mxu0 %v834
        %1033 = vmatprep.subr.mxu0 0.0
        %1034 = vmatpush1.msra.mxu0 %v835
        %1035 = vmatprep.subr.mxu0 0.0
        %1036 = vmatpush1.msra.mxu0 %v836
        %1037 = vmatprep.subr.mxu0 0.0
        %1038 = vmatpush1.msra.mxu0 %v837
        %1039 = vmatprep.subr.mxu0 0.0
        %1040 = vmatpush1.msra.mxu0 %v838
        %1041 = vmatprep.subr.mxu0 0.0
        %1042 = vmatpush1.msra.mxu0 %v839
        %1043 = vmatprep.subr.mxu0 0.0
        %1044 = vmatpush1.msra.mxu0 %v840
        %1045 = vmatprep.subr.mxu0 0.0
        %1046 = vmatpush1.msra.mxu0 %v841
        %1047 = vmatprep.subr.mxu0 0.0
        %1048 = vmatpush1.msra.mxu0 %v842
        %1049 = vmatprep.subr.mxu0 0.0
        %1050 = vmatpush1.msra.mxu0 %v843
        %1051 = vmatprep.subr.mxu0 0.0
        %1052 = vmatpush1.msra.mxu0 %v844
        %1053 = vmatprep.subr.mxu0 0.0
        %1054 = vmatpush1.msra.mxu0 %v845
        %1055 = vmatprep.subr.mxu0 0.0
        %1056 = vmatpush1.msra.mxu0 %v846
        %1057 = vmatprep.subr.mxu0 0.0
        %1058 = vmatpush1.msra.mxu0 %v847
        %1059 = vmatprep.subr.mxu0 0.0
        %1060 = vmatpush1.msra.mxu0 %v848
        %1061 = vmatprep.subr.mxu0 0.0
        %1062 = vmatpush1.msra.mxu0 %v849
        %1063 = vmatprep.subr.mxu0 0.0
        %1064 = vmatpush1.msra.mxu0 %v850
        %1065 = vmatprep.subr.mxu0 0.0
        %1066 = vmatpush1.msra.mxu0 %v851
        %1067 = vmatprep.subr.mxu0 0.0
        %1068 = vmatpush1.msra.mxu0 %v852
        %1069 = vmatprep.subr.mxu0 0.0
        %1070 = vmatpush1.msra.mxu0 %v853
        %1071 = vmatprep.subr.mxu0 0.0
        %1072 = vmatpush1.msra.mxu0 %v854
        %1073 = vmatprep.subr.mxu0 0.0
        %1074 = vmatpush1.msra.mxu0 %v855
        %1075 = vmatprep.subr.mxu0 0.0
        %1076 = vmatpush1.msra.mxu0 %v856
        %1077 = vmatprep.subr.mxu0 0.0
        %1078 = vmatpush1.msra.mxu0 %v857
        %1079 = vmatprep.subr.mxu0 0.0
        %1080 = vmatpush1.msra.mxu0 %v858
        %1081 = vmatprep.subr.mxu0 0.0
        %1082 = vmatpush1.msra.mxu0 %v859
        %1083 = vmatprep.subr.mxu0 0.0
        %1084 = vmatpush1.msra.mxu0 %v860
        %1085 = vmatprep.subr.mxu0 0.0
        %1086 = vmatpush1.msra.mxu0 %v861
        %1087 = vmatprep.subr.mxu0 0.0
        %1088 = vmatpush1.msra.mxu0 %v862
        %1089 = vmatprep.subr.mxu0 0.0
        %1090 = vmatpush1.msra.mxu0 %v863
        %1091 = vmatprep.mubr.f32.mxu0 %v766
        %1092 = vmatmul.mubr.f32.gmra.mrb[0].mxu0 %v765
        %v1093 = vpop.f32.mrb[0].mxu0
        %v1094 = vadd.f32 %v1024, %v1093
        %v1095 = vpop.f32.mrb[0].mxu0
        %1096 = vdwg.mxu0
        %1097 = vmatprep.subr.mxu0 0.0
        %1098 = vmatpush1.msra.mxu0 %v864
        %1099 = vmatprep.subr.mxu0 0.0
        %1100 = vmatpush1.msra.mxu0 %v865
        %1101 = vmatprep.subr.mxu0 0.0
        %1102 = vmatpush1.msra.mxu0 %v866
        %1103 = vmatprep.subr.mxu0 0.0
        %1104 = vmatpush1.msra.mxu0 %v867
        %1105 = vmatprep.subr.mxu0 0.0
        %1106 = vmatpush1.msra.mxu0 %v868
        %1107 = vmatprep.subr.mxu0 0.0
        %1108 = vmatpush1.msra.mxu0 %v869
        %1109 = vmatprep.subr.mxu0 0.0
        %1110 = vmatpush1.msra.mxu0 %v870
        %1111 = vmatprep.subr.mxu0 0.0
        %1112 = vmatpush1.msra.mxu0 %v871
        %1113 = vmatprep.subr.mxu0 0.0
        %1114 = vmatpush1.msra.mxu0 %v872
        %1115 = vmatprep.subr.mxu0 0.0
        %1116 = vmatpush1.msra.mxu0 %v873
        %1117 = vmatprep.subr.mxu0 0.0
        %1118 = vmatpush1.msra.mxu0 %v874
        %1119 = vmatprep.subr.mxu0 0.0
        %1120 = vmatpush1.msra.mxu0 %v875
        %1121 = vmatprep.subr.mxu0 0.0
        %1122 = vmatpush1.msra.mxu0 %v876
        %1123 = vmatprep.subr.mxu0 0.0
        %1124 = vmatpush1.msra.mxu0 %v877
        %1125 = vmatprep.subr.mxu0 0.0
        %1126 = vmatpush1.msra.mxu0 %v878
        %1127 = vmatprep.subr.mxu0 0.0
        %1128 = vmatpush1.msra.mxu0 %v879
        %1129 = vmatprep.subr.mxu0 0.0
        %1130 = vmatpush1.msra.mxu0 0.0
        %1131 = vmatprep.subr.mxu0 0.0
        %1132 = vmatpush1.msra.mxu0 0.0
        %1133 = vmatprep.subr.mxu0 0.0
        %1134 = vmatpush1.msra.mxu0 0.0
        %1135 = vmatprep.subr.mxu0 0.0
        %1136 = vmatpush1.msra.mxu0 0.0
        %1137 = vmatprep.subr.mxu0 0.0
        %1138 = vmatpush1.msra.mxu0 0.0
        %1139 = vmatprep.subr.mxu0 0.0
        %1140 = vmatpush1.msra.mxu0 0.0
        %1141 = vmatprep.subr.mxu0 0.0
        %1142 = vmatpush1.msra.mxu0 0.0
        %1143 = vmatprep.subr.mxu0 0.0
        %1144 = vmatpush1.msra.mxu0 0.0
        %1145 = vmatprep.subr.mxu0 0.0
        %1146 = vmatpush1.msra.mxu0 0.0
        %1147 = vmatprep.subr.mxu0 0.0
        %1148 = vmatpush1.msra.mxu0 0.0
        %1149 = vmatprep.subr.mxu0 0.0
        %1150 = vmatpush1.msra.mxu0 0.0
        %1151 = vmatprep.subr.mxu0 0.0
        %1152 = vmatpush1.msra.mxu0 0.0
        %1153 = vmatprep.subr.mxu0 0.0
        %1154 = vmatpush1.msra.mxu0 0.0
        %1155 = vmatprep.subr.mxu0 0.0
        %1156 = vmatpush1.msra.mxu0 0.0
        %1157 = vmatprep.subr.mxu0 0.0
        %1158 = vmatpush1.msra.mxu0 0.0
        %1159 = vmatprep.subr.mxu0 0.0
        %1160 = vmatpush1.msra.mxu0 0.0
        %1161 = vmatprep.mubr.f32.mxu0 0.0
        %1162 = vmatmul.mubr.f32.gmra.mrb[0].mxu0 %v767
        %v1163 = vpop.f32.mrb[0].mxu0
        %v1164 = vadd.f32 %v1094, %v1163
        %v1165 = vpop.f32.mrb[0].mxu0
        %1166 = vdwg.mxu0
        %v1167 = vmax.f32 %v1164, 0.0
        %v1168 = vld [vmem:[%s5] sm:$0xff]
        %v1169 = vld [vmem:[%s5 + $0x8] sm:$0xff]
        %v1170 = vld [vmem:[%s5 + $0x10] sm:$0xff]
        %v1171 = vld [vmem:[%s5 + $0x18] sm:$0xff]
        %v1172 = vld [vmem:[%s5 + $0x20] sm:$0xff]
        %v1173 = vld [vmem:[%s5 + $0x28] sm:$0xff]
        %v1174 = vld [vmem:[%s5 + $0x30] sm:$0xff]
        %v1175 = vld [vmem:[%s5 + $0x38] sm:$0xff]
        %v1176 = vld [vmem:[%s5 + $0x40] sm:$0xff]
        %v1177 = vld [vmem:[%s5 + $0x48] sm:$0xff]
        %v1178 = vld [vmem:[%s5 + $0x50] sm:$0xff]
        %v1179 = vld [vmem:[%s5 + $0x58] sm:$0xff]
        %v1180 = vld [vmem:[%s5 + $0x60] sm:$0xff]
        %v1181 = vld [vmem:[%s5 + $0x68] sm:$0xff]
        %v1182 = vld [vmem:[%s5 + $0x70] sm:$0xff]
        %v1183 = vld [vmem:[%s5 + $0x78] sm:$0xff]
        %v1184 = vld [vmem:[%s6] sm:$0x1]
        %v1186 = vlaneseq
        %v1187 = vshrl.u32 %v1186, 7
        %v1188 = vsub.s32 0, %v1187
        %v1189 = vrot.slane %v1184, %v1188
        %1191 = vmatprep.subr.mxu0 0.0
        %1192 = vmatpush1.msra.mxu0 %v1168
        %1193 = vmatprep.subr.mxu0 0.0
        %1194 = vmatpush1.msra.mxu0 %v1169
        %1195 = vmatprep.subr.mxu0 0.0
        %1196 = vmatpush1.msra.mxu0 %v1170
        %1197 = vmatprep.subr.mxu0 0.0
        %1198 = vmatpush1.msra.mxu0 %v1171
        %1199 = vmatprep.subr.mxu0 0.0
        %1200 = vmatpush1.msra.mxu0 %v1172
        %1201 = vmatprep.subr.mxu0 0.0
        %1202 = vmatpush1.msra.mxu0 %v1173
        %1203 = vmatprep.subr.mxu0 0.0
        %1204 = vmatpush1.msra.mxu0 %v1174
        %1205 = vmatprep.subr.mxu0 0.0
        %1206 = vmatpush1.msra.mxu0 %v1175
        %1207 = vmatprep.subr.mxu0 0.0
        %1208 = vmatpush1.msra.mxu0 %v1176
        %1209 = vmatprep.subr.mxu0 0.0
        %1210 = vmatpush1.msra.mxu0 %v1177
        %1211 = vmatprep.subr.mxu0 0.0
        %1212 = vmatpush1.msra.mxu0 %v1178
        %1213 = vmatprep.subr.mxu0 0.0
        %1214 = vmatpush1.msra.mxu0 %v1179
        %1215 = vmatprep.subr.mxu0 0.0
        %1216 = vmatpush1.msra.mxu0 %v1180
        %1217 = vmatprep.subr.mxu0 0.0
        %1218 = vmatpush1.msra.mxu0 %v1181
        %1219 = vmatprep.subr.mxu0 0.0
        %1220 = vmatpush1.msra.mxu0 %v1182
        %1221 = vmatprep.subr.mxu0 0.0
        %1222 = vmatpush1.msra.mxu0 %v1183
        %1223 = vmatprep.subr.mxu0 0.0
        %1224 = vmatpush1.msra.mxu0 0.0
        %1225 = vmatprep.subr.mxu0 0.0
        %1226 = vmatpush1.msra.mxu0 0.0
        %1227 = vmatprep.subr.mxu0 0.0
        %1228 = vmatpush1.msra.mxu0 0.0
        %1229 = vmatprep.subr.mxu0 0.0
        %1230 = vmatpush1.msra.mxu0 0.0
        %1231 = vmatprep.subr.mxu0 0.0
        %1232 = vmatpush1.msra.mxu0 0.0
        %1233 = vmatprep.subr.mxu0 0.0
        %1234 = vmatpush1.msra.mxu0 0.0
        %1235 = vmatprep.subr.mxu0 0.0
        %1236 = vmatpush1.msra.mxu0 0.0
        %1237 = vmatprep.subr.mxu0 0.0
        %1238 = vmatpush1.msra.mxu0 0.0
        %1239 = vmatprep.subr.mxu0 0.0
        %1240 = vmatpush1.msra.mxu0 0.0
        %1241 = vmatprep.subr.mxu0 0.0
        %1242 = vmatpush1.msra.mxu0 0.0
        %1243 = vmatprep.subr.mxu0 0.0
        %1244 = vmatpush1.msra.mxu0 0.0
        %1245 = vmatprep.subr.mxu0 0.0
        %1246 = vmatpush1.msra.mxu0 0.0
        %1247 = vmatprep.subr.mxu0 0.0
        %1248 = vmatpush1.msra.mxu0 0.0
        %1249 = vmatprep.subr.mxu0 0.0
        %1250 = vmatpush1.msra.mxu0 0.0
        %1251 = vmatprep.subr.mxu0 0.0
        %1252 = vmatpush1.msra.mxu0 0.0
        %1253 = vmatprep.subr.mxu0 0.0
        %1254 = vmatpush1.msra.mxu0 0.0
        %1255 = vmatprep.mubr.f32.mxu0 0.0
        %1256 = vmatmul.mubr.f32.gmra.mrb[0].mxu0 %v1167
        %v1257 = vpop.f32.mrb[0].mxu0
        %v1258 = vadd.f32 %v1189, %v1257
        %v1259 = vpop.f32.mrb[0].mxu0
        %1260 = vdwg.mxu0
        %1261 = vst [vmem:[%s385] sm:$0xff] %v1258
        %s1262 = sand.u32 %s182, 1
        %s1263 = scalar_lea.sflag [#allocation5], %s1262
        %s1264 = sand.u32 %s182, 1
        %s1265 = smul.addr %s1264, 8
        %s1266 = scalar_lea.vmem [#allocation6], %s1265
        // Predicated region
        $region91: #{tpu_custom_call.1} parent=81 // pred_check
          %p1267 = pneg %p192
        $region92: #{tpu_custom_call.1} parent=81 // pred_check_branch
          %1269 = sbr.rel (%p1267) target = $region94
        $region93: #{tpu_custom_call.1} parent=81 // pred_region
          %s1271 = ssub.s32 128, 128
          %1272 = vsyncadd %s1263, %s1271
          %s1273 = smul.addr %s22, 128
          %s1274 = scalar_lea.hbm %s7, %s1273
          %s1276 = sshll.u32 %s1266, 4
          %s1277 = int_to_ptr.vmem [resolvable:$true] %s1276
          %1279 = dma.vmem_to_hbm [thread:$0]  %s1277, 128, %s1274, %s1263
        $region94: #{tpu_custom_call.1} parent=81 // pred_fallthru
          _
      $region82: #{tpu_custom_call.1} parent=5 // pred_fallthru
        _
      %p1280 = scmp.le.s32.totalorder 2, %s17
      // Predicated region
      $region95: #{tpu_custom_call.1} parent=5 // pred_check
        %p1281 = pneg %p1280
      $region96: #{tpu_custom_call.1} parent=5 // pred_check_branch
        %1283 = sbr.rel (%p1281) target = $region98
      $region97: #{tpu_custom_call.1} parent=5 // pred_region
        %s1284 = ssub.s32 %s17, 2
        // Predicated region
        $region99: #{tpu_custom_call.1} parent=97 // pred_check
          %p1285 = pneg %p198
        $region100: #{tpu_custom_call.1} parent=97 // pred_check_branch
          %1287 = sbr.rel (%p1285) target = $region102
        $region101: #{tpu_custom_call.1} parent=97 // pred_region
          %s1288 = sand.u32 %s183, 1
          %s1289 = scalar_lea.sflag [#allocation5], %s1288
          %s1290 = sand.u32 %s183, 1
          %s1291 = smul.addr %s1290, 8
          %s1292 = scalar_lea.vmem [#allocation6], %s1291
          %1293 = dma.done %s1289, 128
        $region102: #{tpu_custom_call.1} parent=97 // pred_fallthru
          _
      $region98: #{tpu_custom_call.1} parent=5 // pred_fallthru
        _
    $region6: #{tpu_custom_call.1} parent=1 // loop_footer
      %s21 = sadd.s32 1, %s17
    $region7: #{tpu_custom_call.1} parent=1 // loop_footer_branch
      %16 = sbr.rel target = $region3
    $region8: #{tpu_custom_call.1} parent=1 // loop_exit
      _
    %1294 = vsyncpa [#allocation4], 1
    %s1295 = scalar_lea.sflag [#allocation4], 1
    %1296 = vsyncpa %s1295, 1
    %1297 = vsyncpa [#allocation5], 1
    %s1298 = scalar_lea.sflag [#allocation5], 1
    %1299 = vsyncpa %s1298, 1

</llo_original>
